<compile_context>
chip_gen: v6e
topology: v6e:2x2x1
jax: 0.10.0
libtpu: 0.0.40
codegen_flags: <defaults>
</compile_context>

<pallas_src>
import jax
import jax.numpy as jnp
from jax import lax
from jax.experimental import pallas as pl
from jax.experimental.pallas import tpu as pltpu

LANE = 128          # lanes per vreg: batch rows packed per output row
SUB = 8             # f32 sublanes per vreg: output rows packed per dense store
GROUP = SUB * LANE  # 1024 batch rows handled per fori_loop iteration


def predict_kernel(x_ref, w_ref, b_ref, o_ref):
    # x_ref: (TB, F)     f32/bf16 VMEM  (TB % 1024 == 0)
    # w_ref: (F, 1)      f32 VMEM       (weight column, resident across steps)
    # b_ref: (1,)        f32 SMEM       (bias scalar)
    # o_ref: (TB//128, 128) f32 VMEM    (lane-dense output; rows %8 aligned)
    w_col = w_ref[...]          # (F, 1): hoisted once, reused by every matmul
    bias = b_ref[0]

    n_groups = o_ref.shape[0] // SUB    # static

    def group_body(j, carry):
        rows = []
        for c in range(SUB):            # static 8-way unroll inside the loop
            off = pl.multiple_of((j * SUB + c) * LANE, LANE)
            xg = x_ref[pl.ds(off, LANE), :].astype(jnp.float32)       # (128, F)
            # MXU matvec (VPU/XLU-free reduction).
            zg = jnp.dot(xg, w_col, preferred_element_type=jnp.float32)  # (128, 1)
            rows.append(jnp.transpose(zg))                            # (1, 128) XLU
        # Pack 8 rows into one full vreg, batch the bias/sigmoid epilogue,
        # and do a single dense 8-row-aligned store.
        z = jnp.concatenate(rows, axis=0) + bias                      # (8, 128)
        y = pl.reciprocal(1.0 + jnp.exp(-z), approx=False)            # sigmoid
        o_ref[pl.ds(pl.multiple_of(j * SUB, SUB), SUB), :] = y.astype(o_ref.dtype)
        return carry

    lax.fori_loop(0, n_groups, group_body, 0)


def predict_net(x, w, b, *, row_tile=16384):
    """Forward pass of PredictNet.

    x: [B, 100] float32 (or bfloat16, upcast in-kernel)
    w: [1, 100] float32   (PyTorch nn.Linear weight layout: [out, in])
    b: [1]      float32
    returns: [B, 1] float32  == sigmoid(x @ w.T + b).view(B, -1)
    """
    B, F = x.shape

    # bf16 inputs are kept (halves HBM read); everything else -> f32.
    if x.dtype not in (jnp.float32, jnp.bfloat16):
        x = x.astype(jnp.float32)

    n_grp = pl.cdiv(B, GROUP)                       # 1024-row groups
    max_grp_per_step = max(row_tile // GROUP, 1)
    if n_grp <= max_grp_per_step:
        # Whole batch would fit one grid step: split into 2 when possible so
        # the "parallel" axis can shard across both v7x TensorCores.
        grp_per_step = pl.cdiv(n_grp, 2) if n_grp >= 2 else n_grp
    else:
        grp_per_step = max_grp_per_step
    TB = grp_per_step * GROUP                       # batch rows per grid step
    G = TB // LANE                                  # output rows per step (%8==0)
    num_steps = pl.cdiv(B, TB)
    B_pad = num_steps * TB

    xp = x
    if B_pad != B:
        # Zero rows evaluate to sigmoid(b) and are sliced off below.
        xp = jnp.pad(xp, ((0, B_pad - B), (0, 0)))

    w_col = w.astype(jnp.float32).reshape(F, 1)     # (F, 1) MXU operand
    b_vec = b.astype(jnp.float32).reshape(1)

    out2d = pl.pallas_call(
        predict_kernel,
        out_shape=jax.ShapeDtypeStruct((B_pad // LANE, LANE), jnp.float32),
        grid=(num_steps,),
        in_specs=[
            # x: tiled along batch; double-buffered by the BlockSpec pipeline.
            pl.BlockSpec((TB, F), lambda i: (i, 0)),
            # weight column: constant index map -> resident, not re-DMA'd.
            pl.BlockSpec((F, 1), lambda i: (0, 0)),
            # bias: scalar in SMEM, no padded VMEM tile.
            pl.BlockSpec(memory_space=pltpu.MemorySpace.SMEM),
        ],
        # Lane-dense output block (last dim 128 -> unmasked vst).
        out_specs=pl.BlockSpec((G, LANE), lambda i: (i, 0)),
        compiler_params=pltpu.CompilerParams(
            dimension_semantics=("parallel",),
            # ~17 MiB of double-buffered x blocks at TB=16384; 32 MiB covers it
            # on every generation (v5e default is only 16 MiB).
            vmem_limit_bytes=32 * 1024 * 1024,
        ),
    )(xp, w_col, b_vec)

    # (B_pad//128, 128) row-major == batch order; drop padding, view(B, -1).
    return out2d.reshape(-1)[:B].reshape(B, 1)


if __name__ == "__main__":
    key = jax.random.PRNGKey(0)
    k_x, k_w, k_b = jax.random.split(key, 3)

    B, F = 8, 100
    # Deterministic parameter init mimicking nn.Linear default:
    # uniform(-1/sqrt(in_features), 1/sqrt(in_features)).
    bound = 1.0 / (F ** 0.5)
    w = jax.random.uniform(k_w, (1, F), jnp.float32, -bound, bound)
    b = jax.random.uniform(k_b, (1,), jnp.float32, -bound, bound)
    x = jax.random.normal(k_x, (B, F), jnp.float32)

    out = predict_net(x, w, b)
    out = jax.block_until_ready(out)

    # Pure-JAX reference; also exercises the non-128-multiple K=100 contraction.
    ref = jax.nn.sigmoid(x @ w.T + b).reshape(B, -1)
    assert out.shape == (B, 1), out.shape
    assert jnp.allclose(out, ref, atol=1e-5, rtol=1e-5), "mismatch vs reference"

    print("KERNEL_OK")
</pallas_src>

<mosaic_0001>
module attributes {stable_mosaic.version = 11 : i64} {
  func.func @predict_kernel(%arg0: i32, %arg1: memref<1024x100xf32, #tpu.memory_space<vmem>>, %arg2: memref<100x1xf32, #tpu.memory_space<vmem>>, %arg3: memref<1xf32, #tpu.memory_space<smem>>, %arg4: memref<8x128xf32, #tpu.memory_space<vmem>>) attributes {dimension_semantics = [#tpu.dimension_semantics<parallel>], iteration_bounds = array<i64: 1>, scalar_prefetch = 0 : i64, scratch_operands = 0 : i64, tpu.core_type = #tpu.core_type<tc>, window_params = [{transform_indices = @transform_0, window_bounds = array<i64: 1024, 100>}, {pipeline_mode = #tpu.pipeline_mode<synchronous>, transform_indices = @transform_1, window_bounds = array<i64: 100, 1>}, {transform_indices = @transform_2, window_bounds = array<i64: 1>}, {transform_indices = @transform_3, window_bounds = array<i64: 8, 128>}]} {
    %c0 = arith.constant 0 : index
    %c0_0 = arith.constant 0 : index
    %0 = vector.load %arg2[%c0, %c0_0] : memref<100x1xf32, #tpu.memory_space<vmem>>, vector<100x1xf32>
    %c0_1 = arith.constant 0 : index
    %1 = memref.load %arg3[%c0_1] : memref<1xf32, #tpu.memory_space<smem>>
    %c0_i32 = arith.constant 0 : i32
    %c8_i32 = arith.constant 8 : i32
    %2 = arith.muli %c0_i32, %c8_i32 : i32
    %c0_i32_2 = arith.constant 0 : i32
    %3 = arith.addi %2, %c0_i32_2 : i32
    %c128_i32 = arith.constant 128 : i32
    %4 = arith.muli %3, %c128_i32 : i32
    %5 = tpu.assume_multiple %4, 128 : i32
    %6 = arith.index_cast %5 : i32 to index
    %c0_3 = arith.constant 0 : index
    %7 = vector.load %arg1[%6, %c0_3] : memref<1024x100xf32, #tpu.memory_space<vmem>>, vector<128x100xf32>
    %cst = arith.constant dense<0.000000e+00> : vector<128x1xf32>
    %8 = tpu.matmul %7, %0, %cst {dimension_numbers = #tpu.dot_dimension_numbers<[1], [0], [0], [1], [0, 0, 1, 1], [], []>} : vector<128x100xf32>, vector<100x1xf32>, vector<128x1xf32> -> vector<128x1xf32>
    %9 = tpu.transpose %8, [1, 0] : vector<128x1xf32> -> vector<1x128xf32>
    %c8_i32_4 = arith.constant 8 : i32
    %10 = arith.muli %c0_i32, %c8_i32_4 : i32
    %c1_i32 = arith.constant 1 : i32
    %11 = arith.addi %10, %c1_i32 : i32
    %c128_i32_5 = arith.constant 128 : i32
    %12 = arith.muli %11, %c128_i32_5 : i32
    %13 = tpu.assume_multiple %12, 128 : i32
    %14 = arith.index_cast %13 : i32 to index
    %c0_6 = arith.constant 0 : index
    %15 = vector.load %arg1[%14, %c0_6] : memref<1024x100xf32, #tpu.memory_space<vmem>>, vector<128x100xf32>
    %cst_7 = arith.constant dense<0.000000e+00> : vector<128x1xf32>
    %16 = tpu.matmul %15, %0, %cst_7 {dimension_numbers = #tpu.dot_dimension_numbers<[1], [0], [0], [1], [0, 0, 1, 1], [], []>} : vector<128x100xf32>, vector<100x1xf32>, vector<128x1xf32> -> vector<128x1xf32>
    %17 = tpu.transpose %16, [1, 0] : vector<128x1xf32> -> vector<1x128xf32>
    %c8_i32_8 = arith.constant 8 : i32
    %18 = arith.muli %c0_i32, %c8_i32_8 : i32
    %c2_i32 = arith.constant 2 : i32
    %19 = arith.addi %18, %c2_i32 : i32
    %c128_i32_9 = arith.constant 128 : i32
    %20 = arith.muli %19, %c128_i32_9 : i32
    %21 = tpu.assume_multiple %20, 128 : i32
    %22 = arith.index_cast %21 : i32 to index
    %c0_10 = arith.constant 0 : index
    %23 = vector.load %arg1[%22, %c0_10] : memref<1024x100xf32, #tpu.memory_space<vmem>>, vector<128x100xf32>
    %cst_11 = arith.constant dense<0.000000e+00> : vector<128x1xf32>
    %24 = tpu.matmul %23, %0, %cst_11 {dimension_numbers = #tpu.dot_dimension_numbers<[1], [0], [0], [1], [0, 0, 1, 1], [], []>} : vector<128x100xf32>, vector<100x1xf32>, vector<128x1xf32> -> vector<128x1xf32>
    %25 = tpu.transpose %24, [1, 0] : vector<128x1xf32> -> vector<1x128xf32>
    %c8_i32_12 = arith.constant 8 : i32
    %26 = arith.muli %c0_i32, %c8_i32_12 : i32
    %c3_i32 = arith.constant 3 : i32
    %27 = arith.addi %26, %c3_i32 : i32
    %c128_i32_13 = arith.constant 128 : i32
    %28 = arith.muli %27, %c128_i32_13 : i32
    %29 = tpu.assume_multiple %28, 128 : i32
    %30 = arith.index_cast %29 : i32 to index
    %c0_14 = arith.constant 0 : index
    %31 = vector.load %arg1[%30, %c0_14] : memref<1024x100xf32, #tpu.memory_space<vmem>>, vector<128x100xf32>
    %cst_15 = arith.constant dense<0.000000e+00> : vector<128x1xf32>
    %32 = tpu.matmul %31, %0, %cst_15 {dimension_numbers = #tpu.dot_dimension_numbers<[1], [0], [0], [1], [0, 0, 1, 1], [], []>} : vector<128x100xf32>, vector<100x1xf32>, vector<128x1xf32> -> vector<128x1xf32>
    %33 = tpu.transpose %32, [1, 0] : vector<128x1xf32> -> vector<1x128xf32>
    %c8_i32_16 = arith.constant 8 : i32
    %34 = arith.muli %c0_i32, %c8_i32_16 : i32
    %c4_i32 = arith.constant 4 : i32
    %35 = arith.addi %34, %c4_i32 : i32
    %c128_i32_17 = arith.constant 128 : i32
    %36 = arith.muli %35, %c128_i32_17 : i32
    %37 = tpu.assume_multiple %36, 128 : i32
    %38 = arith.index_cast %37 : i32 to index
    %c0_18 = arith.constant 0 : index
    %39 = vector.load %arg1[%38, %c0_18] : memref<1024x100xf32, #tpu.memory_space<vmem>>, vector<128x100xf32>
    %cst_19 = arith.constant dense<0.000000e+00> : vector<128x1xf32>
    %40 = tpu.matmul %39, %0, %cst_19 {dimension_numbers = #tpu.dot_dimension_numbers<[1], [0], [0], [1], [0, 0, 1, 1], [], []>} : vector<128x100xf32>, vector<100x1xf32>, vector<128x1xf32> -> vector<128x1xf32>
    %41 = tpu.transpose %40, [1, 0] : vector<128x1xf32> -> vector<1x128xf32>
    %c8_i32_20 = arith.constant 8 : i32
    %42 = arith.muli %c0_i32, %c8_i32_20 : i32
    %c5_i32 = arith.constant 5 : i32
    %43 = arith.addi %42, %c5_i32 : i32
    %c128_i32_21 = arith.constant 128 : i32
    %44 = arith.muli %43, %c128_i32_21 : i32
    %45 = tpu.assume_multiple %44, 128 : i32
    %46 = arith.index_cast %45 : i32 to index
    %c0_22 = arith.constant 0 : index
    %47 = vector.load %arg1[%46, %c0_22] : memref<1024x100xf32, #tpu.memory_space<vmem>>, vector<128x100xf32>
    %cst_23 = arith.constant dense<0.000000e+00> : vector<128x1xf32>
    %48 = tpu.matmul %47, %0, %cst_23 {dimension_numbers = #tpu.dot_dimension_numbers<[1], [0], [0], [1], [0, 0, 1, 1], [], []>} : vector<128x100xf32>, vector<100x1xf32>, vector<128x1xf32> -> vector<128x1xf32>
    %49 = tpu.transpose %48, [1, 0] : vector<128x1xf32> -> vector<1x128xf32>
    %c8_i32_24 = arith.constant 8 : i32
    %50 = arith.muli %c0_i32, %c8_i32_24 : i32
    %c6_i32 = arith.constant 6 : i32
    %51 = arith.addi %50, %c6_i32 : i32
    %c128_i32_25 = arith.constant 128 : i32
    %52 = arith.muli %51, %c128_i32_25 : i32
    %53 = tpu.assume_multiple %52, 128 : i32
    %54 = arith.index_cast %53 : i32 to index
    %c0_26 = arith.constant 0 : index
    %55 = vector.load %arg1[%54, %c0_26] : memref<1024x100xf32, #tpu.memory_space<vmem>>, vector<128x100xf32>
    %cst_27 = arith.constant dense<0.000000e+00> : vector<128x1xf32>
    %56 = tpu.matmul %55, %0, %cst_27 {dimension_numbers = #tpu.dot_dimension_numbers<[1], [0], [0], [1], [0, 0, 1, 1], [], []>} : vector<128x100xf32>, vector<100x1xf32>, vector<128x1xf32> -> vector<128x1xf32>
    %57 = tpu.transpose %56, [1, 0] : vector<128x1xf32> -> vector<1x128xf32>
    %c8_i32_28 = arith.constant 8 : i32
    %58 = arith.muli %c0_i32, %c8_i32_28 : i32
    %c7_i32 = arith.constant 7 : i32
    %59 = arith.addi %58, %c7_i32 : i32
    %c128_i32_29 = arith.constant 128 : i32
    %60 = arith.muli %59, %c128_i32_29 : i32
    %61 = tpu.assume_multiple %60, 128 : i32
    %62 = arith.index_cast %61 : i32 to index
    %c0_30 = arith.constant 0 : index
    %63 = vector.load %arg1[%62, %c0_30] : memref<1024x100xf32, #tpu.memory_space<vmem>>, vector<128x100xf32>
    %cst_31 = arith.constant dense<0.000000e+00> : vector<128x1xf32>
    %64 = tpu.matmul %63, %0, %cst_31 {dimension_numbers = #tpu.dot_dimension_numbers<[1], [0], [0], [1], [0, 0, 1, 1], [], []>} : vector<128x100xf32>, vector<100x1xf32>, vector<128x1xf32> -> vector<128x1xf32>
    %65 = tpu.transpose %64, [1, 0] : vector<128x1xf32> -> vector<1x128xf32>
    %66 = tpu.concatenate %9, %17, %25, %33, %41, %49, %57, %65 in 0 : vector<1x128xf32>, vector<1x128xf32>, vector<1x128xf32>, vector<1x128xf32>, vector<1x128xf32>, vector<1x128xf32>, vector<1x128xf32>, vector<1x128xf32> -> vector<8x128xf32>
    %67 = vector.broadcast %1 : f32 to vector<8x128xf32>
    %68 = arith.addf %66, %67 : vector<8x128xf32>
    %cst_32 = arith.constant 0.000000e+00 : f32
    %69 = vector.broadcast %cst_32 : f32 to vector<8x128xf32>
    %70 = arith.subf %69, %68 : vector<8x128xf32>
    %71 = math.exp %70 : vector<8x128xf32>
    %cst_33 = arith.constant 1.000000e+00 : f32
    %72 = vector.broadcast %cst_33 : f32 to vector<8x128xf32>
    %73 = arith.addf %72, %71 : vector<8x128xf32>
    %74 = tpu.reciprocal %73 : vector<8x128xf32> -> vector<8x128xf32>
    %c8_i32_34 = arith.constant 8 : i32
    %75 = arith.muli %c0_i32, %c8_i32_34 : i32
    %76 = tpu.assume_multiple %75, 8 : i32
    %77 = arith.index_cast %76 : i32 to index
    %c0_35 = arith.constant 0 : index
    %78 = vector.load %arg4[%77, %c0_35] : memref<8x128xf32, #tpu.memory_space<vmem>>, vector<8x128xf32>
    tpu.vector_store %arg4[%77, %c0_35], %74 {strides = array<i32>} : memref<8x128xf32, #tpu.memory_space<vmem>>, vector<8x128xf32>,
    %c1_i32_36 = arith.constant 1 : i32
    return
  }
  func.func @transform_0(%arg0: i32) -> (i32, i32) {
    %c0_i32 = arith.constant 0 : i32
    %c0_i32_0 = arith.constant 0 : i32
    return %arg0, %c0_i32 : i32, i32
  }
  func.func @transform_1(%arg0: i32) -> (i32, i32) {
    %c0_i32 = arith.constant 0 : i32
    %c0_i32_0 = arith.constant 0 : i32
    %c0_i32_1 = arith.constant 0 : i32
    return %c0_i32, %c0_i32_0 : i32, i32
  }
  func.func @transform_2(%arg0: i32) -> i32 {
    %c0_i32 = arith.constant 0 : i32
    %c0_i32_0 = arith.constant 0 : i32
    return %c0_i32 : i32
  }
  func.func @transform_3(%arg0: i32) -> (i32, i32) {
    %c0_i32 = arith.constant 0 : i32
    %c0_i32_0 = arith.constant 0 : i32
    return %arg0, %c0_i32 : i32, i32
  }
}

</mosaic_0001>

<llo_original>
// kernel: tpu_custom_call.1
$region0: #{tpu_custom_call.1}
  #allocation0 [shape = 'u32[]', space=smem, size = 0x4, offset = 0x4, fixed_abs, tag = 'smem constant byte address 0x4 - core index']
  #allocation1 [shape = 'u32[144,128]{1,0:T(1,128)}', space=vmem, size = 0x12000, scoped, tag = 'internal scratch']
  #allocation2 [shape = 'f32[1]{0:T(128)S(6)}', space=smem, size = 0x200, scoped, tag = 'scoped memory for tpu_custom_call.1']
  %s0 = inlined_call_operand.vmem [shape: f32[1024,100], index: 0, kind: input, shape index: {}]
  %s1 = inlined_call_operand.vmem [shape: f32[100,1], index: 1, kind: input, shape index: {}]
  %s2 = inlined_call_operand.<no memory space> [shape: f32[1], index: 2, kind: input, shape index: {}]
  %s3 = inlined_call_operand.hbm [shape: f32[8,128], index: 3, kind: output, shape index: {}]
  %s4 = sld [smem:[#allocation0]]
  $region22: #{tpu_custom_call.1} parent=0
    _
  %s6 = ssub.s32 1, %s4
  %s7 = scalar_select 0, %s6, %s4
  %8 = sst [smem:[#allocation2]] %s2
  $region1: #{tpu_custom_call.1} parent=0
    #allocation3 [shape = 'u8[4096]{0}', space=vmem, size = 0x1000, scoped, tag = 'output window, operand 0, single buffered']
    #allocation4 [shape = 's32[1]{0}', space=sflag, size = 0x4, scoped, tag = 'scoped memory for tpu_custom_call.1']
    %9 = vsyncpa [#allocation4], 0
    // Predicated region
    $region2: #{tpu_custom_call.1} parent=1 // pred_check
      _
    $region3: #{tpu_custom_call.1} parent=1 // pred_check_branch
      %11 = sbr.rel (0) target = $region5
    $region4: #{tpu_custom_call.1} parent=1 // pred_region
      _
    $region5: #{tpu_custom_call.1} parent=1 // pred_fallthru
      _
    // Predicated region
    $region6: #{tpu_custom_call.1} parent=1 // pred_check
      _
    $region7: #{tpu_custom_call.1} parent=1 // pred_check_branch
      %13 = sbr.rel (0) target = $region9
    $region8: #{tpu_custom_call.1} parent=1 // pred_region
      _
    $region9: #{tpu_custom_call.1} parent=1 // pred_fallthru
      _
    // Predicated region
    $region10: #{tpu_custom_call.1} parent=1 // pred_check
      _
    $region11: #{tpu_custom_call.1} parent=1 // pred_check_branch
      %15 = sbr.rel (0) target = $region13
    $region12: #{tpu_custom_call.1} parent=1 // pred_region
      _
    $region13: #{tpu_custom_call.1} parent=1 // pred_fallthru
      _
    %v16 = vld [vmem:[%s1] sm:$0xff]
    %v17 = vld [vmem:[%s1 + $0x8] sm:$0xff]
    %v18 = vld [vmem:[%s1 + $0x10] sm:$0xff]
    %v19 = vld [vmem:[%s1 + $0x18] sm:$0xff]
    %v20 = vld [vmem:[%s1 + $0x20] sm:$0xff]
    %v21 = vld [vmem:[%s1 + $0x28] sm:$0xff]
    %v22 = vld [vmem:[%s1 + $0x30] sm:$0xff]
    %v23 = vld [vmem:[%s1 + $0x38] sm:$0xff]
    %v24 = vld [vmem:[%s1 + $0x40] sm:$0xff]
    %v25 = vld [vmem:[%s1 + $0x48] sm:$0xff]
    %v26 = vld [vmem:[%s1 + $0x50] sm:$0xff]
    %v27 = vld [vmem:[%s1 + $0x58] sm:$0xff]
    %v28 = vld [vmem:[%s1 + $0x60] sm:$0xf]
    %s29 = sld [smem:[#allocation2]]
    %v30 = vld [vmem:[%s0] sm:$0xff]
    %v31 = vld [vmem:[%s0 + $0x8] sm:$0xff]
    %v32 = vld [vmem:[%s0 + $0x10] sm:$0xff]
    %v33 = vld [vmem:[%s0 + $0x18] sm:$0xff]
    %v34 = vld [vmem:[%s0 + $0x20] sm:$0xff]
    %v35 = vld [vmem:[%s0 + $0x28] sm:$0xff]
    %v36 = vld [vmem:[%s0 + $0x30] sm:$0xff]
    %v37 = vld [vmem:[%s0 + $0x38] sm:$0xff]
    %v38 = vld [vmem:[%s0 + $0x40] sm:$0xff]
    %v39 = vld [vmem:[%s0 + $0x48] sm:$0xff]
    %v40 = vld [vmem:[%s0 + $0x50] sm:$0xff]
    %v41 = vld [vmem:[%s0 + $0x58] sm:$0xff]
    %v42 = vld [vmem:[%s0 + $0x60] sm:$0xff]
    %v43 = vld [vmem:[%s0 + $0x68] sm:$0xff]
    %v44 = vld [vmem:[%s0 + $0x70] sm:$0xff]
    %v45 = vld [vmem:[%s0 + $0x78] sm:$0xff]
    %vm46 = vcmask 818176
    %v48 = vsel %vm46, %v30, 0
    %v51 = vsel %vm46, %v31, 0
    %v54 = vsel %vm46, %v32, 0
    %v57 = vsel %vm46, %v33, 0
    %v60 = vsel %vm46, %v34, 0
    %v63 = vsel %vm46, %v35, 0
    %v66 = vsel %vm46, %v36, 0
    %v69 = vsel %vm46, %v37, 0
    %v72 = vsel %vm46, %v38, 0
    %v75 = vsel %vm46, %v39, 0
    %v78 = vsel %vm46, %v40, 0
    %v81 = vsel %vm46, %v41, 0
    %v84 = vsel %vm46, %v42, 0
    %v87 = vsel %vm46, %v43, 0
    %v90 = vsel %vm46, %v44, 0
    %v93 = vsel %vm46, %v45, 0
    %vm95 = vcmask 1043456
    %v97 = vsel %vm95, %v28, 0
    %99 = vmatprep.subr.mxu0 0.0
    %100 = vmatpush1.msra.mxu0 0.0
    %101 = vmatprep.subr.mxu0 0.0
    %102 = vmatpush1.msra.mxu0 0.0
    %103 = vmatprep.subr.mxu0 0.0
    %104 = vmatpush1.msra.mxu0 0.0
    %105 = vmatprep.subr.mxu0 0.0
    %106 = vmatpush1.msra.mxu0 %v97
    %107 = vmatprep.subr.mxu0 0.0
    %108 = vmatpush1.msra.mxu0 %v27
    %109 = vmatprep.subr.mxu0 0.0
    %110 = vmatpush1.msra.mxu0 %v26
    %111 = vmatprep.subr.mxu0 0.0
    %112 = vmatpush1.msra.mxu0 %v25
    %113 = vmatprep.subr.mxu0 0.0
    %114 = vmatpush1.msra.mxu0 %v24
    %115 = vmatprep.subr.mxu0 0.0
    %116 = vmatpush1.msra.mxu0 %v23
    %117 = vmatprep.subr.mxu0 0.0
    %118 = vmatpush1.msra.mxu0 %v22
    %119 = vmatprep.subr.mxu0 0.0
    %120 = vmatpush1.msra.mxu0 %v21
    %121 = vmatprep.subr.mxu0 0.0
    %122 = vmatpush1.msra.mxu0 %v20
    %123 = vmatprep.subr.mxu0 0.0
    %124 = vmatpush1.msra.mxu0 %v19
    %125 = vmatprep.subr.mxu0 0.0
    %126 = vmatpush1.msra.mxu0 %v18
    %127 = vmatprep.subr.mxu0 0.0
    %128 = vmatpush1.msra.mxu0 %v17
    %129 = vmatprep.subr.mxu0 0.0
    %130 = vmatpush1.msra.mxu0 %v16
    %131 = vmatprep.subr.mxu0 0.0
    %132 = vmatpush2.msra.mxu0 0.0
    %133 = vmatprep.subr.mxu0 0.0
    %134 = vmatpush2.msra.mxu0 0.0
    %135 = vmatprep.subr.mxu0 0.0
    %136 = vmatpush2.msra.mxu0 0.0
    %137 = vmatprep.subr.mxu0 0.0
    %138 = vmatpush2.msra.mxu0 0.0
    %139 = vmatprep.subr.mxu0 0.0
    %140 = vmatpush2.msra.mxu0 0.0
    %141 = vmatprep.subr.mxu0 0.0
    %142 = vmatpush2.msra.mxu0 0.0
    %143 = vmatprep.subr.mxu0 0.0
    %144 = vmatpush2.msra.mxu0 0.0
    %145 = vmatprep.subr.mxu0 0.0
    %146 = vmatpush2.msra.mxu0 0.0
    %147 = vmatprep.subr.mxu0 0.0
    %148 = vmatpush2.msra.mxu0 0.0
    %149 = vmatprep.subr.mxu0 0.0
    %150 = vmatpush2.msra.mxu0 0.0
    %151 = vmatprep.subr.mxu0 0.0
    %152 = vmatpush2.msra.mxu0 0.0
    %153 = vmatprep.subr.mxu0 0.0
    %154 = vmatpush2.msra.mxu0 0.0
    %155 = vmatprep.subr.mxu0 0.0
    %156 = vmatpush2.msra.mxu0 0.0
    %157 = vmatprep.subr.mxu0 0.0
    %158 = vmatpush2.msra.mxu0 0.0
    %159 = vmatprep.subr.mxu0 0.0
    %160 = vmatpush2.msra.mxu0 0.0
    %161 = vmatprep.subr.mxu0 0.0
    %162 = vmatpush2.msra.mxu0 0.0
    %163 = vmatprep.mubr.f32.mxu0 0.0
    %164 = vmatmul.mubr.f32.gmra.mxu0 %v48
    %v165 = vpop.f32.mrf.mxu0
    %v166 = vadd.f32 0.0, %v165
    %v167 = vpop.f32.mrf.mxu0
    %168 = vmatprep.mubr.f32.mxu0 0.0
    %169 = vmatmul.mubr.f32.gmra.mxu0 %v51
    %v170 = vpop.f32.mrf.mxu0
    %v171 = vadd.f32 0.0, %v170
    %v172 = vpop.f32.mrf.mxu0
    %173 = vmatprep.mubr.f32.mxu0 0.0
    %174 = vmatmul.mubr.f32.gmra.mxu0 %v54
    %v175 = vpop.f32.mrf.mxu0
    %v176 = vadd.f32 0.0, %v175
    %v177 = vpop.f32.mrf.mxu0
    %178 = vmatprep.mubr.f32.mxu0 0.0
    %179 = vmatmul.mubr.f32.gmra.mxu0 %v57
    %v180 = vpop.f32.mrf.mxu0
    %v181 = vadd.f32 0.0, %v180
    %v182 = vpop.f32.mrf.mxu0
    %183 = vmatprep.mubr.f32.mxu0 0.0
    %184 = vmatmul.mubr.f32.gmra.mxu0 %v60
    %v185 = vpop.f32.mrf.mxu0
    %v186 = vadd.f32 0.0, %v185
    %v187 = vpop.f32.mrf.mxu0
    %188 = vmatprep.mubr.f32.mxu0 0.0
    %189 = vmatmul.mubr.f32.gmra.mxu0 %v63
    %v190 = vpop.f32.mrf.mxu0
    %v191 = vadd.f32 0.0, %v190
    %v192 = vpop.f32.mrf.mxu0
    %193 = vmatprep.mubr.f32.mxu0 0.0
    %194 = vmatmul.mubr.f32.gmra.mxu0 %v66
    %v195 = vpop.f32.mrf.mxu0
    %v196 = vadd.f32 0.0, %v195
    %v197 = vpop.f32.mrf.mxu0
    %198 = vmatprep.mubr.f32.mxu0 0.0
    %199 = vmatmul.mubr.f32.gmra.mxu0 %v69
    %v200 = vpop.f32.mrf.mxu0
    %v201 = vadd.f32 0.0, %v200
    %v202 = vpop.f32.mrf.mxu0
    %203 = vmatprep.mubr.f32.mxu0 0.0
    %204 = vmatmul.mubr.f32.gmra.mxu0 %v72
    %v205 = vpop.f32.mrf.mxu0
    %v206 = vadd.f32 0.0, %v205
    %v207 = vpop.f32.mrf.mxu0
    %208 = vmatprep.mubr.f32.mxu0 0.0
    %209 = vmatmul.mubr.f32.gmra.mxu0 %v75
    %v210 = vpop.f32.mrf.mxu0
    %v211 = vadd.f32 0.0, %v210
    %v212 = vpop.f32.mrf.mxu0
    %213 = vmatprep.mubr.f32.mxu0 0.0
    %214 = vmatmul.mubr.f32.gmra.mxu0 %v78
    %v215 = vpop.f32.mrf.mxu0
    %v216 = vadd.f32 0.0, %v215
    %v217 = vpop.f32.mrf.mxu0
    %218 = vmatprep.mubr.f32.mxu0 0.0
    %219 = vmatmul.mubr.f32.gmra.mxu0 %v81
    %v220 = vpop.f32.mrf.mxu0
    %v221 = vadd.f32 0.0, %v220
    %v222 = vpop.f32.mrf.mxu0
    %223 = vmatprep.mubr.f32.mxu0 0.0
    %224 = vmatmul.mubr.f32.gmra.mxu0 %v84
    %v225 = vpop.f32.mrf.mxu0
    %v226 = vadd.f32 0.0, %v225
    %v227 = vpop.f32.mrf.mxu0
    %228 = vmatprep.mubr.f32.mxu0 0.0
    %229 = vmatmul.mubr.f32.gmra.mxu0 %v87
    %v230 = vpop.f32.mrf.mxu0
    %v231 = vadd.f32 0.0, %v230
    %v232 = vpop.f32.mrf.mxu0
    %233 = vmatprep.mubr.f32.mxu0 0.0
    %234 = vmatmul.mubr.f32.gmra.mxu0 %v90
    %v235 = vpop.f32.mrf.mxu0
    %v236 = vadd.f32 0.0, %v235
    %v237 = vpop.f32.mrf.mxu0
    %238 = vmatprep.mubr.f32.mxu0 0.0
    %239 = vmatmul.mubr.f32.gmra.mxu0 %v93
    %v240 = vpop.f32.mrf.mxu0
    %v241 = vadd.f32 0.0, %v240
    %v242 = vpop.f32.mrf.mxu0
    %243 = vdwg.mxu0
    %244 = vxpose.xlu0.b32.start [1/16] %v166, 128
    %245 = vxpose.xlu0.b32.cont [2/16] %v171, 128
    %246 = vxpose.xlu0.b32.cont [3/16] %v176, 128
    %247 = vxpose.xlu0.b32.cont [4/16] %v181, 128
    %248 = vxpose.xlu0.b32.cont [5/16] %v186, 128
    %249 = vxpose.xlu0.b32.cont [6/16] %v191, 128
    %250 = vxpose.xlu0.b32.cont [7/16] %v196, 128
    %251 = vxpose.xlu0.b32.cont [8/16] %v201, 128
    %252 = vxpose.xlu0.b32.cont [9/16] %v206, 128
    %253 = vxpose.xlu0.b32.cont [10/16] %v211, 128
    %254 = vxpose.xlu0.b32.cont [11/16] %v216, 128
    %255 = vxpose.xlu0.b32.cont [12/16] %v221, 128
    %256 = vxpose.xlu0.b32.cont [13/16] %v226, 128
    %257 = vxpose.xlu0.b32.cont [14/16] %v231, 128
    %258 = vxpose.xlu0.b32.cont [15/16] %v236, 128
    %259 = vxpose.xlu0.b32.end [16/16] %v241, 128
    %v260 = vpop.trf.xlu0
    %v261 = vpop.trf.xlu0
    %v262 = vpop.trf.xlu0
    %v263 = vpop.trf.xlu0
    %v264 = vpop.trf.xlu0
    %v265 = vpop.trf.xlu0
    %v266 = vpop.trf.xlu0
    %v267 = vpop.trf.xlu0
    %v268 = vpop.trf.xlu0
    %v269 = vpop.trf.xlu0
    %v270 = vpop.trf.xlu0
    %v271 = vpop.trf.xlu0
    %v272 = vpop.trf.xlu0
    %v273 = vpop.trf.xlu0
    %v274 = vpop.trf.xlu0
    %v275 = vpop.trf.xlu0
    %s276 = scalar_lea.vmem %s0, 128
    %v277 = vld [vmem:[%s276] sm:$0xff]
    %v278 = vld [vmem:[%s276 + $0x8] sm:$0xff]
    %v279 = vld [vmem:[%s276 + $0x10] sm:$0xff]
    %v280 = vld [vmem:[%s276 + $0x18] sm:$0xff]
    %v281 = vld [vmem:[%s276 + $0x20] sm:$0xff]
    %v282 = vld [vmem:[%s276 + $0x28] sm:$0xff]
    %v283 = vld [vmem:[%s276 + $0x30] sm:$0xff]
    %v284 = vld [vmem:[%s276 + $0x38] sm:$0xff]
    %v285 = vld [vmem:[%s276 + $0x40] sm:$0xff]
    %v286 = vld [vmem:[%s276 + $0x48] sm:$0xff]
    %v287 = vld [vmem:[%s276 + $0x50] sm:$0xff]
    %v288 = vld [vmem:[%s276 + $0x58] sm:$0xff]
    %v289 = vld [vmem:[%s276 + $0x60] sm:$0xff]
    %v290 = vld [vmem:[%s276 + $0x68] sm:$0xff]
    %v291 = vld [vmem:[%s276 + $0x70] sm:$0xff]
    %v292 = vld [vmem:[%s276 + $0x78] sm:$0xff]
    %v294 = vsel %vm46, %v277, 0
    %v297 = vsel %vm46, %v278, 0
    %v300 = vsel %vm46, %v279, 0
    %v303 = vsel %vm46, %v280, 0
    %v306 = vsel %vm46, %v281, 0
    %v309 = vsel %vm46, %v282, 0
    %v312 = vsel %vm46, %v283, 0
    %v315 = vsel %vm46, %v284, 0
    %v318 = vsel %vm46, %v285, 0
    %v321 = vsel %vm46, %v286, 0
    %v324 = vsel %vm46, %v287, 0
    %v327 = vsel %vm46, %v288, 0
    %v330 = vsel %vm46, %v289, 0
    %v333 = vsel %vm46, %v290, 0
    %v336 = vsel %vm46, %v291, 0
    %v339 = vsel %vm46, %v292, 0
    %341 = vmatprep.subr.mxu0 0.0
    %342 = vmatpush1.msra.mxu0 0.0
    %343 = vmatprep.subr.mxu0 0.0
    %344 = vmatpush1.msra.mxu0 0.0
    %345 = vmatprep.subr.mxu0 0.0
    %346 = vmatpush1.msra.mxu0 0.0
    %347 = vmatprep.subr.mxu0 0.0
    %348 = vmatpush1.msra.mxu0 %v97
    %349 = vmatprep.subr.mxu0 0.0
    %350 = vmatpush1.msra.mxu0 %v27
    %351 = vmatprep.subr.mxu0 0.0
    %352 = vmatpush1.msra.mxu0 %v26
    %353 = vmatprep.subr.mxu0 0.0
    %354 = vmatpush1.msra.mxu0 %v25
    %355 = vmatprep.subr.mxu0 0.0
    %356 = vmatpush1.msra.mxu0 %v24
    %357 = vmatprep.subr.mxu0 0.0
    %358 = vmatpush1.msra.mxu0 %v23
    %359 = vmatprep.subr.mxu0 0.0
    %360 = vmatpush1.msra.mxu0 %v22
    %361 = vmatprep.subr.mxu0 0.0
    %362 = vmatpush1.msra.mxu0 %v21
    %363 = vmatprep.subr.mxu0 0.0
    %364 = vmatpush1.msra.mxu0 %v20
    %365 = vmatprep.subr.mxu0 0.0
    %366 = vmatpush1.msra.mxu0 %v19
    %367 = vmatprep.subr.mxu0 0.0
    %368 = vmatpush1.msra.mxu0 %v18
    %369 = vmatprep.subr.mxu0 0.0
    %370 = vmatpush1.msra.mxu0 %v17
    %371 = vmatprep.subr.mxu0 0.0
    %372 = vmatpush1.msra.mxu0 %v16
    %373 = vmatprep.subr.mxu0 0.0
    %374 = vmatpush2.msra.mxu0 0.0
    %375 = vmatprep.subr.mxu0 0.0
    %376 = vmatpush2.msra.mxu0 0.0
    %377 = vmatprep.subr.mxu0 0.0
    %378 = vmatpush2.msra.mxu0 0.0
    %379 = vmatprep.subr.mxu0 0.0
    %380 = vmatpush2.msra.mxu0 0.0
    %381 = vmatprep.subr.mxu0 0.0
    %382 = vmatpush2.msra.mxu0 0.0
    %383 = vmatprep.subr.mxu0 0.0
    %384 = vmatpush2.msra.mxu0 0.0
    %385 = vmatprep.subr.mxu0 0.0
    %386 = vmatpush2.msra.mxu0 0.0
    %387 = vmatprep.subr.mxu0 0.0
    %388 = vmatpush2.msra.mxu0 0.0
    %389 = vmatprep.subr.mxu0 0.0
    %390 = vmatpush2.msra.mxu0 0.0
    %391 = vmatprep.subr.mxu0 0.0
    %392 = vmatpush2.msra.mxu0 0.0
    %393 = vmatprep.subr.mxu0 0.0
    %394 = vmatpush2.msra.mxu0 0.0
    %395 = vmatprep.subr.mxu0 0.0
    %396 = vmatpush2.msra.mxu0 0.0
    %397 = vmatprep.subr.mxu0 0.0
    %398 = vmatpush2.msra.mxu0 0.0
    %399 = vmatprep.subr.mxu0 0.0
    %400 = vmatpush2.msra.mxu0 0.0
    %401 = vmatprep.subr.mxu0 0.0
    %402 = vmatpush2.msra.mxu0 0.0
    %403 = vmatprep.subr.mxu0 0.0
    %404 = vmatpush2.msra.mxu0 0.0
    %405 = vmatprep.mubr.f32.mxu0 0.0
    %406 = vmatmul.mubr.f32.gmra.mxu0 %v294
    %v407 = vpop.f32.mrf.mxu0
    %v408 = vadd.f32 0.0, %v407
    %v409 = vpop.f32.mrf.mxu0
    %410 = vmatprep.mubr.f32.mxu0 0.0
    %411 = vmatmul.mubr.f32.gmra.mxu0 %v297
    %v412 = vpop.f32.mrf.mxu0
    %v413 = vadd.f32 0.0, %v412
    %v414 = vpop.f32.mrf.mxu0
    %415 = vmatprep.mubr.f32.mxu0 0.0
    %416 = vmatmul.mubr.f32.gmra.mxu0 %v300
    %v417 = vpop.f32.mrf.mxu0
    %v418 = vadd.f32 0.0, %v417
    %v419 = vpop.f32.mrf.mxu0
    %420 = vmatprep.mubr.f32.mxu0 0.0
    %421 = vmatmul.mubr.f32.gmra.mxu0 %v303
    %v422 = vpop.f32.mrf.mxu0
    %v423 = vadd.f32 0.0, %v422
    %v424 = vpop.f32.mrf.mxu0
    %425 = vmatprep.mubr.f32.mxu0 0.0
    %426 = vmatmul.mubr.f32.gmra.mxu0 %v306
    %v427 = vpop.f32.mrf.mxu0
    %v428 = vadd.f32 0.0, %v427
    %v429 = vpop.f32.mrf.mxu0
    %430 = vmatprep.mubr.f32.mxu0 0.0
    %431 = vmatmul.mubr.f32.gmra.mxu0 %v309
    %v432 = vpop.f32.mrf.mxu0
    %v433 = vadd.f32 0.0, %v432
    %v434 = vpop.f32.mrf.mxu0
    %435 = vmatprep.mubr.f32.mxu0 0.0
    %436 = vmatmul.mubr.f32.gmra.mxu0 %v312
    %v437 = vpop.f32.mrf.mxu0
    %v438 = vadd.f32 0.0, %v437
    %v439 = vpop.f32.mrf.mxu0
    %440 = vmatprep.mubr.f32.mxu0 0.0
    %441 = vmatmul.mubr.f32.gmra.mxu0 %v315
    %v442 = vpop.f32.mrf.mxu0
    %v443 = vadd.f32 0.0, %v442
    %v444 = vpop.f32.mrf.mxu0
    %445 = vmatprep.mubr.f32.mxu0 0.0
    %446 = vmatmul.mubr.f32.gmra.mxu0 %v318
    %v447 = vpop.f32.mrf.mxu0
    %v448 = vadd.f32 0.0, %v447
    %v449 = vpop.f32.mrf.mxu0
    %450 = vmatprep.mubr.f32.mxu0 0.0
    %451 = vmatmul.mubr.f32.gmra.mxu0 %v321
    %v452 = vpop.f32.mrf.mxu0
    %v453 = vadd.f32 0.0, %v452
    %v454 = vpop.f32.mrf.mxu0
    %455 = vmatprep.mubr.f32.mxu0 0.0
    %456 = vmatmul.mubr.f32.gmra.mxu0 %v324
    %v457 = vpop.f32.mrf.mxu0
    %v458 = vadd.f32 0.0, %v457
    %v459 = vpop.f32.mrf.mxu0
    %460 = vmatprep.mubr.f32.mxu0 0.0
    %461 = vmatmul.mubr.f32.gmra.mxu0 %v327
    %v462 = vpop.f32.mrf.mxu0
    %v463 = vadd.f32 0.0, %v462
    %v464 = vpop.f32.mrf.mxu0
    %465 = vmatprep.mubr.f32.mxu0 0.0
    %466 = vmatmul.mubr.f32.gmra.mxu0 %v330
    %v467 = vpop.f32.mrf.mxu0
    %v468 = vadd.f32 0.0, %v467
    %v469 = vpop.f32.mrf.mxu0
    %470 = vmatprep.mubr.f32.mxu0 0.0
    %471 = vmatmul.mubr.f32.gmra.mxu0 %v333
    %v472 = vpop.f32.mrf.mxu0
    %v473 = vadd.f32 0.0, %v472
    %v474 = vpop.f32.mrf.mxu0
    %475 = vmatprep.mubr.f32.mxu0 0.0
    %476 = vmatmul.mubr.f32.gmra.mxu0 %v336
    %v477 = vpop.f32.mrf.mxu0
    %v478 = vadd.f32 0.0, %v477
    %v479 = vpop.f32.mrf.mxu0
    %480 = vmatprep.mubr.f32.mxu0 0.0
    %481 = vmatmul.mubr.f32.gmra.mxu0 %v339
    %v482 = vpop.f32.mrf.mxu0
    %v483 = vadd.f32 0.0, %v482
    %v484 = vpop.f32.mrf.mxu0
    %485 = vdwg.mxu0
    %486 = vxpose.xlu0.b32.start [1/16] %v408, 128
    %487 = vxpose.xlu0.b32.cont [2/16] %v413, 128
    %488 = vxpose.xlu0.b32.cont [3/16] %v418, 128
    %489 = vxpose.xlu0.b32.cont [4/16] %v423, 128
    %490 = vxpose.xlu0.b32.cont [5/16] %v428, 128
    %491 = vxpose.xlu0.b32.cont [6/16] %v433, 128
    %492 = vxpose.xlu0.b32.cont [7/16] %v438, 128
    %493 = vxpose.xlu0.b32.cont [8/16] %v443, 128
    %494 = vxpose.xlu0.b32.cont [9/16] %v448, 128
    %495 = vxpose.xlu0.b32.cont [10/16] %v453, 128
    %496 = vxpose.xlu0.b32.cont [11/16] %v458, 128
    %497 = vxpose.xlu0.b32.cont [12/16] %v463, 128
    %498 = vxpose.xlu0.b32.cont [13/16] %v468, 128
    %499 = vxpose.xlu0.b32.cont [14/16] %v473, 128
    %500 = vxpose.xlu0.b32.cont [15/16] %v478, 128
    %501 = vxpose.xlu0.b32.end [16/16] %v483, 128
    %v502 = vpop.trf.xlu0
    %v503 = vpop.trf.xlu0
    %v504 = vpop.trf.xlu0
    %v505 = vpop.trf.xlu0
    %v506 = vpop.trf.xlu0
    %v507 = vpop.trf.xlu0
    %v508 = vpop.trf.xlu0
    %v509 = vpop.trf.xlu0
    %v510 = vpop.trf.xlu0
    %v511 = vpop.trf.xlu0
    %v512 = vpop.trf.xlu0
    %v513 = vpop.trf.xlu0
    %v514 = vpop.trf.xlu0
    %v515 = vpop.trf.xlu0
    %v516 = vpop.trf.xlu0
    %v517 = vpop.trf.xlu0
    %s518 = scalar_lea.vmem %s0, 256
    %v519 = vld [vmem:[%s518] sm:$0xff]
    %v520 = vld [vmem:[%s518 + $0x8] sm:$0xff]
    %v521 = vld [vmem:[%s518 + $0x10] sm:$0xff]
    %v522 = vld [vmem:[%s518 + $0x18] sm:$0xff]
    %v523 = vld [vmem:[%s518 + $0x20] sm:$0xff]
    %v524 = vld [vmem:[%s518 + $0x28] sm:$0xff]
    %v525 = vld [vmem:[%s518 + $0x30] sm:$0xff]
    %v526 = vld [vmem:[%s518 + $0x38] sm:$0xff]
    %v527 = vld [vmem:[%s518 + $0x40] sm:$0xff]
    %v528 = vld [vmem:[%s518 + $0x48] sm:$0xff]
    %v529 = vld [vmem:[%s518 + $0x50] sm:$0xff]
    %v530 = vld [vmem:[%s518 + $0x58] sm:$0xff]
    %v531 = vld [vmem:[%s518 + $0x60] sm:$0xff]
    %v532 = vld [vmem:[%s518 + $0x68] sm:$0xff]
    %v533 = vld [vmem:[%s518 + $0x70] sm:$0xff]
    %v534 = vld [vmem:[%s518 + $0x78] sm:$0xff]
    %v536 = vsel %vm46, %v519, 0
    %v539 = vsel %vm46, %v520, 0
    %v542 = vsel %vm46, %v521, 0
    %v545 = vsel %vm46, %v522, 0
    %v548 = vsel %vm46, %v523, 0
    %v551 = vsel %vm46, %v524, 0
    %v554 = vsel %vm46, %v525, 0
    %v557 = vsel %vm46, %v526, 0
    %v560 = vsel %vm46, %v527, 0
    %v563 = vsel %vm46, %v528, 0
    %v566 = vsel %vm46, %v529, 0
    %v569 = vsel %vm46, %v530, 0
    %v572 = vsel %vm46, %v531, 0
    %v575 = vsel %vm46, %v532, 0
    %v578 = vsel %vm46, %v533, 0
    %v581 = vsel %vm46, %v534, 0
    %583 = vmatprep.subr.mxu0 0.0
    %584 = vmatpush1.msra.mxu0 0.0
    %585 = vmatprep.subr.mxu0 0.0
    %586 = vmatpush1.msra.mxu0 0.0
    %587 = vmatprep.subr.mxu0 0.0
    %588 = vmatpush1.msra.mxu0 0.0
    %589 = vmatprep.subr.mxu0 0.0
    %590 = vmatpush1.msra.mxu0 %v97
    %591 = vmatprep.subr.mxu0 0.0
    %592 = vmatpush1.msra.mxu0 %v27
    %593 = vmatprep.subr.mxu0 0.0
    %594 = vmatpush1.msra.mxu0 %v26
    %595 = vmatprep.subr.mxu0 0.0
    %596 = vmatpush1.msra.mxu0 %v25
    %597 = vmatprep.subr.mxu0 0.0
    %598 = vmatpush1.msra.mxu0 %v24
    %599 = vmatprep.subr.mxu0 0.0
    %600 = vmatpush1.msra.mxu0 %v23
    %601 = vmatprep.subr.mxu0 0.0
    %602 = vmatpush1.msra.mxu0 %v22
    %603 = vmatprep.subr.mxu0 0.0
    %604 = vmatpush1.msra.mxu0 %v21
    %605 = vmatprep.subr.mxu0 0.0
    %606 = vmatpush1.msra.mxu0 %v20
    %607 = vmatprep.subr.mxu0 0.0
    %608 = vmatpush1.msra.mxu0 %v19
    %609 = vmatprep.subr.mxu0 0.0
    %610 = vmatpush1.msra.mxu0 %v18
    %611 = vmatprep.subr.mxu0 0.0
    %612 = vmatpush1.msra.mxu0 %v17
    %613 = vmatprep.subr.mxu0 0.0
    %614 = vmatpush1.msra.mxu0 %v16
    %615 = vmatprep.subr.mxu0 0.0
    %616 = vmatpush2.msra.mxu0 0.0
    %617 = vmatprep.subr.mxu0 0.0
    %618 = vmatpush2.msra.mxu0 0.0
    %619 = vmatprep.subr.mxu0 0.0
    %620 = vmatpush2.msra.mxu0 0.0
    %621 = vmatprep.subr.mxu0 0.0
    %622 = vmatpush2.msra.mxu0 0.0
    %623 = vmatprep.subr.mxu0 0.0
    %624 = vmatpush2.msra.mxu0 0.0
    %625 = vmatprep.subr.mxu0 0.0
    %626 = vmatpush2.msra.mxu0 0.0
    %627 = vmatprep.subr.mxu0 0.0
    %628 = vmatpush2.msra.mxu0 0.0
    %629 = vmatprep.subr.mxu0 0.0
    %630 = vmatpush2.msra.mxu0 0.0
    %631 = vmatprep.subr.mxu0 0.0
    %632 = vmatpush2.msra.mxu0 0.0
    %633 = vmatprep.subr.mxu0 0.0
    %634 = vmatpush2.msra.mxu0 0.0
    %635 = vmatprep.subr.mxu0 0.0
    %636 = vmatpush2.msra.mxu0 0.0
    %637 = vmatprep.subr.mxu0 0.0
    %638 = vmatpush2.msra.mxu0 0.0
    %639 = vmatprep.subr.mxu0 0.0
    %640 = vmatpush2.msra.mxu0 0.0
    %641 = vmatprep.subr.mxu0 0.0
    %642 = vmatpush2.msra.mxu0 0.0
    %643 = vmatprep.subr.mxu0 0.0
    %644 = vmatpush2.msra.mxu0 0.0
    %645 = vmatprep.subr.mxu0 0.0
    %646 = vmatpush2.msra.mxu0 0.0
    %647 = vmatprep.mubr.f32.mxu0 0.0
    %648 = vmatmul.mubr.f32.gmra.mxu0 %v536
    %v649 = vpop.f32.mrf.mxu0
    %v650 = vadd.f32 0.0, %v649
    %v651 = vpop.f32.mrf.mxu0
    %652 = vmatprep.mubr.f32.mxu0 0.0
    %653 = vmatmul.mubr.f32.gmra.mxu0 %v539
    %v654 = vpop.f32.mrf.mxu0
    %v655 = vadd.f32 0.0, %v654
    %v656 = vpop.f32.mrf.mxu0
    %657 = vmatprep.mubr.f32.mxu0 0.0
    %658 = vmatmul.mubr.f32.gmra.mxu0 %v542
    %v659 = vpop.f32.mrf.mxu0
    %v660 = vadd.f32 0.0, %v659
    %v661 = vpop.f32.mrf.mxu0
    %662 = vmatprep.mubr.f32.mxu0 0.0
    %663 = vmatmul.mubr.f32.gmra.mxu0 %v545
    %v664 = vpop.f32.mrf.mxu0
    %v665 = vadd.f32 0.0, %v664
    %v666 = vpop.f32.mrf.mxu0
    %667 = vmatprep.mubr.f32.mxu0 0.0
    %668 = vmatmul.mubr.f32.gmra.mxu0 %v548
    %v669 = vpop.f32.mrf.mxu0
    %v670 = vadd.f32 0.0, %v669
    %v671 = vpop.f32.mrf.mxu0
    %672 = vmatprep.mubr.f32.mxu0 0.0
    %673 = vmatmul.mubr.f32.gmra.mxu0 %v551
    %v674 = vpop.f32.mrf.mxu0
    %v675 = vadd.f32 0.0, %v674
    %v676 = vpop.f32.mrf.mxu0
    %677 = vmatprep.mubr.f32.mxu0 0.0
    %678 = vmatmul.mubr.f32.gmra.mxu0 %v554
    %v679 = vpop.f32.mrf.mxu0
    %v680 = vadd.f32 0.0, %v679
    %v681 = vpop.f32.mrf.mxu0
    %682 = vmatprep.mubr.f32.mxu0 0.0
    %683 = vmatmul.mubr.f32.gmra.mxu0 %v557
    %v684 = vpop.f32.mrf.mxu0
    %v685 = vadd.f32 0.0, %v684
    %v686 = vpop.f32.mrf.mxu0
    %687 = vmatprep.mubr.f32.mxu0 0.0
    %688 = vmatmul.mubr.f32.gmra.mxu0 %v560
    %v689 = vpop.f32.mrf.mxu0
    %v690 = vadd.f32 0.0, %v689
    %v691 = vpop.f32.mrf.mxu0
    %692 = vmatprep.mubr.f32.mxu0 0.0
    %693 = vmatmul.mubr.f32.gmra.mxu0 %v563
    %v694 = vpop.f32.mrf.mxu0
    %v695 = vadd.f32 0.0, %v694
    %v696 = vpop.f32.mrf.mxu0
    %697 = vmatprep.mubr.f32.mxu0 0.0
    %698 = vmatmul.mubr.f32.gmra.mxu0 %v566
    %v699 = vpop.f32.mrf.mxu0
    %v700 = vadd.f32 0.0, %v699
    %v701 = vpop.f32.mrf.mxu0
    %702 = vmatprep.mubr.f32.mxu0 0.0
    %703 = vmatmul.mubr.f32.gmra.mxu0 %v569
    %v704 = vpop.f32.mrf.mxu0
    %v705 = vadd.f32 0.0, %v704
    %v706 = vpop.f32.mrf.mxu0
    %707 = vmatprep.mubr.f32.mxu0 0.0
    %708 = vmatmul.mubr.f32.gmra.mxu0 %v572
    %v709 = vpop.f32.mrf.mxu0
    %v710 = vadd.f32 0.0, %v709
    %v711 = vpop.f32.mrf.mxu0
    %712 = vmatprep.mubr.f32.mxu0 0.0
    %713 = vmatmul.mubr.f32.gmra.mxu0 %v575
    %v714 = vpop.f32.mrf.mxu0
    %v715 = vadd.f32 0.0, %v714
    %v716 = vpop.f32.mrf.mxu0
    %717 = vmatprep.mubr.f32.mxu0 0.0
    %718 = vmatmul.mubr.f32.gmra.mxu0 %v578
    %v719 = vpop.f32.mrf.mxu0
    %v720 = vadd.f32 0.0, %v719
    %v721 = vpop.f32.mrf.mxu0
    %722 = vmatprep.mubr.f32.mxu0 0.0
    %723 = vmatmul.mubr.f32.gmra.mxu0 %v581
    %v724 = vpop.f32.mrf.mxu0
    %v725 = vadd.f32 0.0, %v724
    %v726 = vpop.f32.mrf.mxu0
    %727 = vdwg.mxu0
    %728 = vxpose.xlu0.b32.start [1/16] %v650, 128
    %729 = vxpose.xlu0.b32.cont [2/16] %v655, 128
    %730 = vxpose.xlu0.b32.cont [3/16] %v660, 128
    %731 = vxpose.xlu0.b32.cont [4/16] %v665, 128
    %732 = vxpose.xlu0.b32.cont [5/16] %v670, 128
    %733 = vxpose.xlu0.b32.cont [6/16] %v675, 128
    %734 = vxpose.xlu0.b32.cont [7/16] %v680, 128
    %735 = vxpose.xlu0.b32.cont [8/16] %v685, 128
    %736 = vxpose.xlu0.b32.cont [9/16] %v690, 128
    %737 = vxpose.xlu0.b32.cont [10/16] %v695, 128
    %738 = vxpose.xlu0.b32.cont [11/16] %v700, 128
    %739 = vxpose.xlu0.b32.cont [12/16] %v705, 128
    %740 = vxpose.xlu0.b32.cont [13/16] %v710, 128
    %741 = vxpose.xlu0.b32.cont [14/16] %v715, 128
    %742 = vxpose.xlu0.b32.cont [15/16] %v720, 128
    %743 = vxpose.xlu0.b32.end [16/16] %v725, 128
    %v744 = vpop.trf.xlu0
    %v745 = vpop.trf.xlu0
    %v746 = vpop.trf.xlu0
    %v747 = vpop.trf.xlu0
    %v748 = vpop.trf.xlu0
    %v749 = vpop.trf.xlu0
    %v750 = vpop.trf.xlu0
    %v751 = vpop.trf.xlu0
    %v752 = vpop.trf.xlu0
    %v753 = vpop.trf.xlu0
    %v754 = vpop.trf.xlu0
    %v755 = vpop.trf.xlu0
    %v756 = vpop.trf.xlu0
    %v757 = vpop.trf.xlu0
    %v758 = vpop.trf.xlu0
    %v759 = vpop.trf.xlu0
    %s760 = scalar_lea.vmem %s0, 384
    %v761 = vld [vmem:[%s760] sm:$0xff]
    %v762 = vld [vmem:[%s760 + $0x8] sm:$0xff]
    %v763 = vld [vmem:[%s760 + $0x10] sm:$0xff]
    %v764 = vld [vmem:[%s760 + $0x18] sm:$0xff]
    %v765 = vld [vmem:[%s760 + $0x20] sm:$0xff]
    %v766 = vld [vmem:[%s760 + $0x28] sm:$0xff]
    %v767 = vld [vmem:[%s760 + $0x30] sm:$0xff]
    %v768 = vld [vmem:[%s760 + $0x38] sm:$0xff]
    %v769 = vld [vmem:[%s760 + $0x40] sm:$0xff]
    %v770 = vld [vmem:[%s760 + $0x48] sm:$0xff]
    %v771 = vld [vmem:[%s760 + $0x50] sm:$0xff]
    %v772 = vld [vmem:[%s760 + $0x58] sm:$0xff]
    %v773 = vld [vmem:[%s760 + $0x60] sm:$0xff]
    %v774 = vld [vmem:[%s760 + $0x68] sm:$0xff]
    %v775 = vld [vmem:[%s760 + $0x70] sm:$0xff]
    %v776 = vld [vmem:[%s760 + $0x78] sm:$0xff]
    %v778 = vsel %vm46, %v761, 0
    %v781 = vsel %vm46, %v762, 0
    %v784 = vsel %vm46, %v763, 0
    %v787 = vsel %vm46, %v764, 0
    %v790 = vsel %vm46, %v765, 0
    %v793 = vsel %vm46, %v766, 0
    %v796 = vsel %vm46, %v767, 0
    %v799 = vsel %vm46, %v768, 0
    %v802 = vsel %vm46, %v769, 0
    %v805 = vsel %vm46, %v770, 0
    %v808 = vsel %vm46, %v771, 0
    %v811 = vsel %vm46, %v772, 0
    %v814 = vsel %vm46, %v773, 0
    %v817 = vsel %vm46, %v774, 0
    %v820 = vsel %vm46, %v775, 0
    %v823 = vsel %vm46, %v776, 0
    %825 = vmatprep.subr.mxu0 0.0
    %826 = vmatpush1.msra.mxu0 0.0
    %827 = vmatprep.subr.mxu0 0.0
    %828 = vmatpush1.msra.mxu0 0.0
    %829 = vmatprep.subr.mxu0 0.0
    %830 = vmatpush1.msra.mxu0 0.0
    %831 = vmatprep.subr.mxu0 0.0
    %832 = vmatpush1.msra.mxu0 %v97
    %833 = vmatprep.subr.mxu0 0.0
    %834 = vmatpush1.msra.mxu0 %v27
    %835 = vmatprep.subr.mxu0 0.0
    %836 = vmatpush1.msra.mxu0 %v26
    %837 = vmatprep.subr.mxu0 0.0
    %838 = vmatpush1.msra.mxu0 %v25
    %839 = vmatprep.subr.mxu0 0.0
    %840 = vmatpush1.msra.mxu0 %v24
    %841 = vmatprep.subr.mxu0 0.0
    %842 = vmatpush1.msra.mxu0 %v23
    %843 = vmatprep.subr.mxu0 0.0
    %844 = vmatpush1.msra.mxu0 %v22
    %845 = vmatprep.subr.mxu0 0.0
    %846 = vmatpush1.msra.mxu0 %v21
    %847 = vmatprep.subr.mxu0 0.0
    %848 = vmatpush1.msra.mxu0 %v20
    %849 = vmatprep.subr.mxu0 0.0
    %850 = vmatpush1.msra.mxu0 %v19
    %851 = vmatprep.subr.mxu0 0.0
    %852 = vmatpush1.msra.mxu0 %v18
    %853 = vmatprep.subr.mxu0 0.0
    %854 = vmatpush1.msra.mxu0 %v17
    %855 = vmatprep.subr.mxu0 0.0
    %856 = vmatpush1.msra.mxu0 %v16
    %857 = vmatprep.subr.mxu0 0.0
    %858 = vmatpush2.msra.mxu0 0.0
    %859 = vmatprep.subr.mxu0 0.0
    %860 = vmatpush2.msra.mxu0 0.0
    %861 = vmatprep.subr.mxu0 0.0
    %862 = vmatpush2.msra.mxu0 0.0
    %863 = vmatprep.subr.mxu0 0.0
    %864 = vmatpush2.msra.mxu0 0.0
    %865 = vmatprep.subr.mxu0 0.0
    %866 = vmatpush2.msra.mxu0 0.0
    %867 = vmatprep.subr.mxu0 0.0
    %868 = vmatpush2.msra.mxu0 0.0
    %869 = vmatprep.subr.mxu0 0.0
    %870 = vmatpush2.msra.mxu0 0.0
    %871 = vmatprep.subr.mxu0 0.0
    %872 = vmatpush2.msra.mxu0 0.0
    %873 = vmatprep.subr.mxu0 0.0
    %874 = vmatpush2.msra.mxu0 0.0
    %875 = vmatprep.subr.mxu0 0.0
    %876 = vmatpush2.msra.mxu0 0.0
    %877 = vmatprep.subr.mxu0 0.0
    %878 = vmatpush2.msra.mxu0 0.0
    %879 = vmatprep.subr.mxu0 0.0
    %880 = vmatpush2.msra.mxu0 0.0
    %881 = vmatprep.subr.mxu0 0.0
    %882 = vmatpush2.msra.mxu0 0.0
    %883 = vmatprep.subr.mxu0 0.0
    %884 = vmatpush2.msra.mxu0 0.0
    %885 = vmatprep.subr.mxu0 0.0
    %886 = vmatpush2.msra.mxu0 0.0
    %887 = vmatprep.subr.mxu0 0.0
    %888 = vmatpush2.msra.mxu0 0.0
    %889 = vmatprep.mubr.f32.mxu0 0.0
    %890 = vmatmul.mubr.f32.gmra.mxu0 %v778
    %v891 = vpop.f32.mrf.mxu0
    %v892 = vadd.f32 0.0, %v891
    %v893 = vpop.f32.mrf.mxu0
    %894 = vmatprep.mubr.f32.mxu0 0.0
    %895 = vmatmul.mubr.f32.gmra.mxu0 %v781
    %v896 = vpop.f32.mrf.mxu0
    %v897 = vadd.f32 0.0, %v896
    %v898 = vpop.f32.mrf.mxu0
    %899 = vmatprep.mubr.f32.mxu0 0.0
    %900 = vmatmul.mubr.f32.gmra.mxu0 %v784
    %v901 = vpop.f32.mrf.mxu0
    %v902 = vadd.f32 0.0, %v901
    %v903 = vpop.f32.mrf.mxu0
    %904 = vmatprep.mubr.f32.mxu0 0.0
    %905 = vmatmul.mubr.f32.gmra.mxu0 %v787
    %v906 = vpop.f32.mrf.mxu0
    %v907 = vadd.f32 0.0, %v906
    %v908 = vpop.f32.mrf.mxu0
    %909 = vmatprep.mubr.f32.mxu0 0.0
    %910 = vmatmul.mubr.f32.gmra.mxu0 %v790
    %v911 = vpop.f32.mrf.mxu0
    %v912 = vadd.f32 0.0, %v911
    %v913 = vpop.f32.mrf.mxu0
    %914 = vmatprep.mubr.f32.mxu0 0.0
    %915 = vmatmul.mubr.f32.gmra.mxu0 %v793
    %v916 = vpop.f32.mrf.mxu0
    %v917 = vadd.f32 0.0, %v916
    %v918 = vpop.f32.mrf.mxu0
    %919 = vmatprep.mubr.f32.mxu0 0.0
    %920 = vmatmul.mubr.f32.gmra.mxu0 %v796
    %v921 = vpop.f32.mrf.mxu0
    %v922 = vadd.f32 0.0, %v921
    %v923 = vpop.f32.mrf.mxu0
    %924 = vmatprep.mubr.f32.mxu0 0.0
    %925 = vmatmul.mubr.f32.gmra.mxu0 %v799
    %v926 = vpop.f32.mrf.mxu0
    %v927 = vadd.f32 0.0, %v926
    %v928 = vpop.f32.mrf.mxu0
    %929 = vmatprep.mubr.f32.mxu0 0.0
    %930 = vmatmul.mubr.f32.gmra.mxu0 %v802
    %v931 = vpop.f32.mrf.mxu0
    %v932 = vadd.f32 0.0, %v931
    %v933 = vpop.f32.mrf.mxu0
    %934 = vmatprep.mubr.f32.mxu0 0.0
    %935 = vmatmul.mubr.f32.gmra.mxu0 %v805
    %v936 = vpop.f32.mrf.mxu0
    %v937 = vadd.f32 0.0, %v936
    %v938 = vpop.f32.mrf.mxu0
    %939 = vmatprep.mubr.f32.mxu0 0.0
    %940 = vmatmul.mubr.f32.gmra.mxu0 %v808
    %v941 = vpop.f32.mrf.mxu0
    %v942 = vadd.f32 0.0, %v941
    %v943 = vpop.f32.mrf.mxu0
    %944 = vmatprep.mubr.f32.mxu0 0.0
    %945 = vmatmul.mubr.f32.gmra.mxu0 %v811
    %v946 = vpop.f32.mrf.mxu0
    %v947 = vadd.f32 0.0, %v946
    %v948 = vpop.f32.mrf.mxu0
    %949 = vmatprep.mubr.f32.mxu0 0.0
    %950 = vmatmul.mubr.f32.gmra.mxu0 %v814
    %v951 = vpop.f32.mrf.mxu0
    %v952 = vadd.f32 0.0, %v951
    %v953 = vpop.f32.mrf.mxu0
    %954 = vmatprep.mubr.f32.mxu0 0.0
    %955 = vmatmul.mubr.f32.gmra.mxu0 %v817
    %v956 = vpop.f32.mrf.mxu0
    %v957 = vadd.f32 0.0, %v956
    %v958 = vpop.f32.mrf.mxu0
    %959 = vmatprep.mubr.f32.mxu0 0.0
    %960 = vmatmul.mubr.f32.gmra.mxu0 %v820
    %v961 = vpop.f32.mrf.mxu0
    %v962 = vadd.f32 0.0, %v961
    %v963 = vpop.f32.mrf.mxu0
    %964 = vmatprep.mubr.f32.mxu0 0.0
    %965 = vmatmul.mubr.f32.gmra.mxu0 %v823
    %v966 = vpop.f32.mrf.mxu0
    %v967 = vadd.f32 0.0, %v966
    %v968 = vpop.f32.mrf.mxu0
    %969 = vdwg.mxu0
    %970 = vxpose.xlu0.b32.start [1/16] %v892, 128
    %971 = vxpose.xlu0.b32.cont [2/16] %v897, 128
    %972 = vxpose.xlu0.b32.cont [3/16] %v902, 128
    %973 = vxpose.xlu0.b32.cont [4/16] %v907, 128
    %974 = vxpose.xlu0.b32.cont [5/16] %v912, 128
    %975 = vxpose.xlu0.b32.cont [6/16] %v917, 128
    %976 = vxpose.xlu0.b32.cont [7/16] %v922, 128
    %977 = vxpose.xlu0.b32.cont [8/16] %v927, 128
    %978 = vxpose.xlu0.b32.cont [9/16] %v932, 128
    %979 = vxpose.xlu0.b32.cont [10/16] %v937, 128
    %980 = vxpose.xlu0.b32.cont [11/16] %v942, 128
    %981 = vxpose.xlu0.b32.cont [12/16] %v947, 128
    %982 = vxpose.xlu0.b32.cont [13/16] %v952, 128
    %983 = vxpose.xlu0.b32.cont [14/16] %v957, 128
    %984 = vxpose.xlu0.b32.cont [15/16] %v962, 128
    %985 = vxpose.xlu0.b32.end [16/16] %v967, 128
    %v986 = vpop.trf.xlu0
    %v987 = vpop.trf.xlu0
    %v988 = vpop.trf.xlu0
    %v989 = vpop.trf.xlu0
    %v990 = vpop.trf.xlu0
    %v991 = vpop.trf.xlu0
    %v992 = vpop.trf.xlu0
    %v993 = vpop.trf.xlu0
    %v994 = vpop.trf.xlu0
    %v995 = vpop.trf.xlu0
    %v996 = vpop.trf.xlu0
    %v997 = vpop.trf.xlu0
    %v998 = vpop.trf.xlu0
    %v999 = vpop.trf.xlu0
    %v1000 = vpop.trf.xlu0
    %v1001 = vpop.trf.xlu0
    %s1002 = scalar_lea.vmem %s0, 512
    %v1003 = vld [vmem:[%s1002] sm:$0xff]
    %v1004 = vld [vmem:[%s1002 + $0x8] sm:$0xff]
    %v1005 = vld [vmem:[%s1002 + $0x10] sm:$0xff]
    %v1006 = vld [vmem:[%s1002 + $0x18] sm:$0xff]
    %v1007 = vld [vmem:[%s1002 + $0x20] sm:$0xff]
    %v1008 = vld [vmem:[%s1002 + $0x28] sm:$0xff]
    %v1009 = vld [vmem:[%s1002 + $0x30] sm:$0xff]
    %v1010 = vld [vmem:[%s1002 + $0x38] sm:$0xff]
    %v1011 = vld [vmem:[%s1002 + $0x40] sm:$0xff]
    %v1012 = vld [vmem:[%s1002 + $0x48] sm:$0xff]
    %v1013 = vld [vmem:[%s1002 + $0x50] sm:$0xff]
    %v1014 = vld [vmem:[%s1002 + $0x58] sm:$0xff]
    %v1015 = vld [vmem:[%s1002 + $0x60] sm:$0xff]
    %v1016 = vld [vmem:[%s1002 + $0x68] sm:$0xff]
    %v1017 = vld [vmem:[%s1002 + $0x70] sm:$0xff]
    %v1018 = vld [vmem:[%s1002 + $0x78] sm:$0xff]
    %v1020 = vsel %vm46, %v1003, 0
    %v1023 = vsel %vm46, %v1004, 0
    %v1026 = vsel %vm46, %v1005, 0
    %v1029 = vsel %vm46, %v1006, 0
    %v1032 = vsel %vm46, %v1007, 0
    %v1035 = vsel %vm46, %v1008, 0
    %v1038 = vsel %vm46, %v1009, 0
    %v1041 = vsel %vm46, %v1010, 0
    %v1044 = vsel %vm46, %v1011, 0
    %v1047 = vsel %vm46, %v1012, 0
    %v1050 = vsel %vm46, %v1013, 0
    %v1053 = vsel %vm46, %v1014, 0
    %v1056 = vsel %vm46, %v1015, 0
    %v1059 = vsel %vm46, %v1016, 0
    %v1062 = vsel %vm46, %v1017, 0
    %v1065 = vsel %vm46, %v1018, 0
    %1067 = vmatprep.subr.mxu0 0.0
    %1068 = vmatpush1.msra.mxu0 0.0
    %1069 = vmatprep.subr.mxu0 0.0
    %1070 = vmatpush1.msra.mxu0 0.0
    %1071 = vmatprep.subr.mxu0 0.0
    %1072 = vmatpush1.msra.mxu0 0.0
    %1073 = vmatprep.subr.mxu0 0.0
    %1074 = vmatpush1.msra.mxu0 %v97
    %1075 = vmatprep.subr.mxu0 0.0
    %1076 = vmatpush1.msra.mxu0 %v27
    %1077 = vmatprep.subr.mxu0 0.0
    %1078 = vmatpush1.msra.mxu0 %v26
    %1079 = vmatprep.subr.mxu0 0.0
    %1080 = vmatpush1.msra.mxu0 %v25
    %1081 = vmatprep.subr.mxu0 0.0
    %1082 = vmatpush1.msra.mxu0 %v24
    %1083 = vmatprep.subr.mxu0 0.0
    %1084 = vmatpush1.msra.mxu0 %v23
    %1085 = vmatprep.subr.mxu0 0.0
    %1086 = vmatpush1.msra.mxu0 %v22
    %1087 = vmatprep.subr.mxu0 0.0
    %1088 = vmatpush1.msra.mxu0 %v21
    %1089 = vmatprep.subr.mxu0 0.0
    %1090 = vmatpush1.msra.mxu0 %v20
    %1091 = vmatprep.subr.mxu0 0.0
    %1092 = vmatpush1.msra.mxu0 %v19
    %1093 = vmatprep.subr.mxu0 0.0
    %1094 = vmatpush1.msra.mxu0 %v18
    %1095 = vmatprep.subr.mxu0 0.0
    %1096 = vmatpush1.msra.mxu0 %v17
    %1097 = vmatprep.subr.mxu0 0.0
    %1098 = vmatpush1.msra.mxu0 %v16
    %1099 = vmatprep.subr.mxu0 0.0
    %1100 = vmatpush2.msra.mxu0 0.0
    %1101 = vmatprep.subr.mxu0 0.0
    %1102 = vmatpush2.msra.mxu0 0.0
    %1103 = vmatprep.subr.mxu0 0.0
    %1104 = vmatpush2.msra.mxu0 0.0
    %1105 = vmatprep.subr.mxu0 0.0
    %1106 = vmatpush2.msra.mxu0 0.0
    %1107 = vmatprep.subr.mxu0 0.0
    %1108 = vmatpush2.msra.mxu0 0.0
    %1109 = vmatprep.subr.mxu0 0.0
    %1110 = vmatpush2.msra.mxu0 0.0
    %1111 = vmatprep.subr.mxu0 0.0
    %1112 = vmatpush2.msra.mxu0 0.0
    %1113 = vmatprep.subr.mxu0 0.0
    %1114 = vmatpush2.msra.mxu0 0.0
    %1115 = vmatprep.subr.mxu0 0.0
    %1116 = vmatpush2.msra.mxu0 0.0
    %1117 = vmatprep.subr.mxu0 0.0
    %1118 = vmatpush2.msra.mxu0 0.0
    %1119 = vmatprep.subr.mxu0 0.0
    %1120 = vmatpush2.msra.mxu0 0.0
    %1121 = vmatprep.subr.mxu0 0.0
    %1122 = vmatpush2.msra.mxu0 0.0
    %1123 = vmatprep.subr.mxu0 0.0
    %1124 = vmatpush2.msra.mxu0 0.0
    %1125 = vmatprep.subr.mxu0 0.0
    %1126 = vmatpush2.msra.mxu0 0.0
    %1127 = vmatprep.subr.mxu0 0.0
    %1128 = vmatpush2.msra.mxu0 0.0
    %1129 = vmatprep.subr.mxu0 0.0
    %1130 = vmatpush2.msra.mxu0 0.0
    %1131 = vmatprep.mubr.f32.mxu0 0.0
    %1132 = vmatmul.mubr.f32.gmra.mxu0 %v1020
    %v1133 = vpop.f32.mrf.mxu0
    %v1134 = vadd.f32 0.0, %v1133
    %v1135 = vpop.f32.mrf.mxu0
    %1136 = vmatprep.mubr.f32.mxu0 0.0
    %1137 = vmatmul.mubr.f32.gmra.mxu0 %v1023
    %v1138 = vpop.f32.mrf.mxu0
    %v1139 = vadd.f32 0.0, %v1138
    %v1140 = vpop.f32.mrf.mxu0
    %1141 = vmatprep.mubr.f32.mxu0 0.0
    %1142 = vmatmul.mubr.f32.gmra.mxu0 %v1026
    %v1143 = vpop.f32.mrf.mxu0
    %v1144 = vadd.f32 0.0, %v1143
    %v1145 = vpop.f32.mrf.mxu0
    %1146 = vmatprep.mubr.f32.mxu0 0.0
    %1147 = vmatmul.mubr.f32.gmra.mxu0 %v1029
    %v1148 = vpop.f32.mrf.mxu0
    %v1149 = vadd.f32 0.0, %v1148
    %v1150 = vpop.f32.mrf.mxu0
    %1151 = vmatprep.mubr.f32.mxu0 0.0
    %1152 = vmatmul.mubr.f32.gmra.mxu0 %v1032
    %v1153 = vpop.f32.mrf.mxu0
    %v1154 = vadd.f32 0.0, %v1153
    %v1155 = vpop.f32.mrf.mxu0
    %1156 = vmatprep.mubr.f32.mxu0 0.0
    %1157 = vmatmul.mubr.f32.gmra.mxu0 %v1035
    %v1158 = vpop.f32.mrf.mxu0
    %v1159 = vadd.f32 0.0, %v1158
    %v1160 = vpop.f32.mrf.mxu0
    %1161 = vmatprep.mubr.f32.mxu0 0.0
    %1162 = vmatmul.mubr.f32.gmra.mxu0 %v1038
    %v1163 = vpop.f32.mrf.mxu0
    %v1164 = vadd.f32 0.0, %v1163
    %v1165 = vpop.f32.mrf.mxu0
    %1166 = vmatprep.mubr.f32.mxu0 0.0
    %1167 = vmatmul.mubr.f32.gmra.mxu0 %v1041
    %v1168 = vpop.f32.mrf.mxu0
    %v1169 = vadd.f32 0.0, %v1168
    %v1170 = vpop.f32.mrf.mxu0
    %1171 = vmatprep.mubr.f32.mxu0 0.0
    %1172 = vmatmul.mubr.f32.gmra.mxu0 %v1044
    %v1173 = vpop.f32.mrf.mxu0
    %v1174 = vadd.f32 0.0, %v1173
    %v1175 = vpop.f32.mrf.mxu0
    %1176 = vmatprep.mubr.f32.mxu0 0.0
    %1177 = vmatmul.mubr.f32.gmra.mxu0 %v1047
    %v1178 = vpop.f32.mrf.mxu0
    %v1179 = vadd.f32 0.0, %v1178
    %v1180 = vpop.f32.mrf.mxu0
    %1181 = vmatprep.mubr.f32.mxu0 0.0
    %1182 = vmatmul.mubr.f32.gmra.mxu0 %v1050
    %v1183 = vpop.f32.mrf.mxu0
    %v1184 = vadd.f32 0.0, %v1183
    %v1185 = vpop.f32.mrf.mxu0
    %1186 = vmatprep.mubr.f32.mxu0 0.0
    %1187 = vmatmul.mubr.f32.gmra.mxu0 %v1053
    %v1188 = vpop.f32.mrf.mxu0
    %v1189 = vadd.f32 0.0, %v1188
    %v1190 = vpop.f32.mrf.mxu0
    %1191 = vmatprep.mubr.f32.mxu0 0.0
    %1192 = vmatmul.mubr.f32.gmra.mxu0 %v1056
    %v1193 = vpop.f32.mrf.mxu0
    %v1194 = vadd.f32 0.0, %v1193
    %v1195 = vpop.f32.mrf.mxu0
    %1196 = vmatprep.mubr.f32.mxu0 0.0
    %1197 = vmatmul.mubr.f32.gmra.mxu0 %v1059
    %v1198 = vpop.f32.mrf.mxu0
    %v1199 = vadd.f32 0.0, %v1198
    %v1200 = vpop.f32.mrf.mxu0
    %1201 = vmatprep.mubr.f32.mxu0 0.0
    %1202 = vmatmul.mubr.f32.gmra.mxu0 %v1062
    %v1203 = vpop.f32.mrf.mxu0
    %v1204 = vadd.f32 0.0, %v1203
    %v1205 = vpop.f32.mrf.mxu0
    %1206 = vmatprep.mubr.f32.mxu0 0.0
    %1207 = vmatmul.mubr.f32.gmra.mxu0 %v1065
    %v1208 = vpop.f32.mrf.mxu0
    %v1209 = vadd.f32 0.0, %v1208
    %v1210 = vpop.f32.mrf.mxu0
    %1211 = vdwg.mxu0
    %1212 = vxpose.xlu0.b32.start [1/16] %v1134, 128
    %1213 = vxpose.xlu0.b32.cont [2/16] %v1139, 128
    %1214 = vxpose.xlu0.b32.cont [3/16] %v1144, 128
    %1215 = vxpose.xlu0.b32.cont [4/16] %v1149, 128
    %1216 = vxpose.xlu0.b32.cont [5/16] %v1154, 128
    %1217 = vxpose.xlu0.b32.cont [6/16] %v1159, 128
    %1218 = vxpose.xlu0.b32.cont [7/16] %v1164, 128
    %1219 = vxpose.xlu0.b32.cont [8/16] %v1169, 128
    %1220 = vxpose.xlu0.b32.cont [9/16] %v1174, 128
    %1221 = vxpose.xlu0.b32.cont [10/16] %v1179, 128
    %1222 = vxpose.xlu0.b32.cont [11/16] %v1184, 128
    %1223 = vxpose.xlu0.b32.cont [12/16] %v1189, 128
    %1224 = vxpose.xlu0.b32.cont [13/16] %v1194, 128
    %1225 = vxpose.xlu0.b32.cont [14/16] %v1199, 128
    %1226 = vxpose.xlu0.b32.cont [15/16] %v1204, 128
    %1227 = vxpose.xlu0.b32.end [16/16] %v1209, 128
    %v1228 = vpop.trf.xlu0
    %v1229 = vpop.trf.xlu0
    %v1230 = vpop.trf.xlu0
    %v1231 = vpop.trf.xlu0
    %v1232 = vpop.trf.xlu0
    %v1233 = vpop.trf.xlu0
    %v1234 = vpop.trf.xlu0
    %v1235 = vpop.trf.xlu0
    %v1236 = vpop.trf.xlu0
    %v1237 = vpop.trf.xlu0
    %v1238 = vpop.trf.xlu0
    %v1239 = vpop.trf.xlu0
    %v1240 = vpop.trf.xlu0
    %v1241 = vpop.trf.xlu0
    %v1242 = vpop.trf.xlu0
    %v1243 = vpop.trf.xlu0
    %s1244 = scalar_lea.vmem %s0, 640
    %v1245 = vld [vmem:[%s1244] sm:$0xff]
    %v1246 = vld [vmem:[%s1244 + $0x8] sm:$0xff]
    %v1247 = vld [vmem:[%s1244 + $0x10] sm:$0xff]
    %v1248 = vld [vmem:[%s1244 + $0x18] sm:$0xff]
    %v1249 = vld [vmem:[%s1244 + $0x20] sm:$0xff]
    %v1250 = vld [vmem:[%s1244 + $0x28] sm:$0xff]
    %v1251 = vld [vmem:[%s1244 + $0x30] sm:$0xff]
    %v1252 = vld [vmem:[%s1244 + $0x38] sm:$0xff]
    %v1253 = vld [vmem:[%s1244 + $0x40] sm:$0xff]
    %v1254 = vld [vmem:[%s1244 + $0x48] sm:$0xff]
    %v1255 = vld [vmem:[%s1244 + $0x50] sm:$0xff]
    %v1256 = vld [vmem:[%s1244 + $0x58] sm:$0xff]
    %v1257 = vld [vmem:[%s1244 + $0x60] sm:$0xff]
    %v1258 = vld [vmem:[%s1244 + $0x68] sm:$0xff]
    %v1259 = vld [vmem:[%s1244 + $0x70] sm:$0xff]
    %v1260 = vld [vmem:[%s1244 + $0x78] sm:$0xff]
    %v1262 = vsel %vm46, %v1245, 0
    %v1265 = vsel %vm46, %v1246, 0
    %v1268 = vsel %vm46, %v1247, 0
    %v1271 = vsel %vm46, %v1248, 0
    %v1274 = vsel %vm46, %v1249, 0
    %v1277 = vsel %vm46, %v1250, 0
    %v1280 = vsel %vm46, %v1251, 0
    %v1283 = vsel %vm46, %v1252, 0
    %v1286 = vsel %vm46, %v1253, 0
    %v1289 = vsel %vm46, %v1254, 0
    %v1292 = vsel %vm46, %v1255, 0
    %v1295 = vsel %vm46, %v1256, 0
    %v1298 = vsel %vm46, %v1257, 0
    %v1301 = vsel %vm46, %v1258, 0
    %v1304 = vsel %vm46, %v1259, 0
    %v1307 = vsel %vm46, %v1260, 0
    %1309 = vmatprep.subr.mxu0 0.0
    %1310 = vmatpush1.msra.mxu0 0.0
    %1311 = vmatprep.subr.mxu0 0.0
    %1312 = vmatpush1.msra.mxu0 0.0
    %1313 = vmatprep.subr.mxu0 0.0
    %1314 = vmatpush1.msra.mxu0 0.0
    %1315 = vmatprep.subr.mxu0 0.0
    %1316 = vmatpush1.msra.mxu0 %v97
    %1317 = vmatprep.subr.mxu0 0.0
    %1318 = vmatpush1.msra.mxu0 %v27
    %1319 = vmatprep.subr.mxu0 0.0
    %1320 = vmatpush1.msra.mxu0 %v26
    %1321 = vmatprep.subr.mxu0 0.0
    %1322 = vmatpush1.msra.mxu0 %v25
    %1323 = vmatprep.subr.mxu0 0.0
    %1324 = vmatpush1.msra.mxu0 %v24
    %1325 = vmatprep.subr.mxu0 0.0
    %1326 = vmatpush1.msra.mxu0 %v23
    %1327 = vmatprep.subr.mxu0 0.0
    %1328 = vmatpush1.msra.mxu0 %v22
    %1329 = vmatprep.subr.mxu0 0.0
    %1330 = vmatpush1.msra.mxu0 %v21
    %1331 = vmatprep.subr.mxu0 0.0
    %1332 = vmatpush1.msra.mxu0 %v20
    %1333 = vmatprep.subr.mxu0 0.0
    %1334 = vmatpush1.msra.mxu0 %v19
    %1335 = vmatprep.subr.mxu0 0.0
    %1336 = vmatpush1.msra.mxu0 %v18
    %1337 = vmatprep.subr.mxu0 0.0
    %1338 = vmatpush1.msra.mxu0 %v17
    %1339 = vmatprep.subr.mxu0 0.0
    %1340 = vmatpush1.msra.mxu0 %v16
    %1341 = vmatprep.subr.mxu0 0.0
    %1342 = vmatpush2.msra.mxu0 0.0
    %1343 = vmatprep.subr.mxu0 0.0
    %1344 = vmatpush2.msra.mxu0 0.0
    %1345 = vmatprep.subr.mxu0 0.0
    %1346 = vmatpush2.msra.mxu0 0.0
    %1347 = vmatprep.subr.mxu0 0.0
    %1348 = vmatpush2.msra.mxu0 0.0
    %1349 = vmatprep.subr.mxu0 0.0
    %1350 = vmatpush2.msra.mxu0 0.0
    %1351 = vmatprep.subr.mxu0 0.0
    %1352 = vmatpush2.msra.mxu0 0.0
    %1353 = vmatprep.subr.mxu0 0.0
    %1354 = vmatpush2.msra.mxu0 0.0
    %1355 = vmatprep.subr.mxu0 0.0
    %1356 = vmatpush2.msra.mxu0 0.0
    %1357 = vmatprep.subr.mxu0 0.0
    %1358 = vmatpush2.msra.mxu0 0.0
    %1359 = vmatprep.subr.mxu0 0.0
    %1360 = vmatpush2.msra.mxu0 0.0
    %1361 = vmatprep.subr.mxu0 0.0
    %1362 = vmatpush2.msra.mxu0 0.0
    %1363 = vmatprep.subr.mxu0 0.0
    %1364 = vmatpush2.msra.mxu0 0.0
    %1365 = vmatprep.subr.mxu0 0.0
    %1366 = vmatpush2.msra.mxu0 0.0
    %1367 = vmatprep.subr.mxu0 0.0
    %1368 = vmatpush2.msra.mxu0 0.0
    %1369 = vmatprep.subr.mxu0 0.0
    %1370 = vmatpush2.msra.mxu0 0.0
    %1371 = vmatprep.subr.mxu0 0.0
    %1372 = vmatpush2.msra.mxu0 0.0
    %1373 = vmatprep.mubr.f32.mxu0 0.0
    %1374 = vmatmul.mubr.f32.gmra.mxu0 %v1262
    %v1375 = vpop.f32.mrf.mxu0
    %v1376 = vadd.f32 0.0, %v1375
    %v1377 = vpop.f32.mrf.mxu0
    %1378 = vmatprep.mubr.f32.mxu0 0.0
    %1379 = vmatmul.mubr.f32.gmra.mxu0 %v1265
    %v1380 = vpop.f32.mrf.mxu0
    %v1381 = vadd.f32 0.0, %v1380
    %v1382 = vpop.f32.mrf.mxu0
    %1383 = vmatprep.mubr.f32.mxu0 0.0
    %1384 = vmatmul.mubr.f32.gmra.mxu0 %v1268
    %v1385 = vpop.f32.mrf.mxu0
    %v1386 = vadd.f32 0.0, %v1385
    %v1387 = vpop.f32.mrf.mxu0
    %1388 = vmatprep.mubr.f32.mxu0 0.0
    %1389 = vmatmul.mubr.f32.gmra.mxu0 %v1271
    %v1390 = vpop.f32.mrf.mxu0
    %v1391 = vadd.f32 0.0, %v1390
    %v1392 = vpop.f32.mrf.mxu0
    %1393 = vmatprep.mubr.f32.mxu0 0.0
    %1394 = vmatmul.mubr.f32.gmra.mxu0 %v1274
    %v1395 = vpop.f32.mrf.mxu0
    %v1396 = vadd.f32 0.0, %v1395
    %v1397 = vpop.f32.mrf.mxu0
    %1398 = vmatprep.mubr.f32.mxu0 0.0
    %1399 = vmatmul.mubr.f32.gmra.mxu0 %v1277
    %v1400 = vpop.f32.mrf.mxu0
    %v1401 = vadd.f32 0.0, %v1400
    %v1402 = vpop.f32.mrf.mxu0
    %1403 = vmatprep.mubr.f32.mxu0 0.0
    %1404 = vmatmul.mubr.f32.gmra.mxu0 %v1280
    %v1405 = vpop.f32.mrf.mxu0
    %v1406 = vadd.f32 0.0, %v1405
    %v1407 = vpop.f32.mrf.mxu0
    %1408 = vmatprep.mubr.f32.mxu0 0.0
    %1409 = vmatmul.mubr.f32.gmra.mxu0 %v1283
    %v1410 = vpop.f32.mrf.mxu0
    %v1411 = vadd.f32 0.0, %v1410
    %v1412 = vpop.f32.mrf.mxu0
    %1413 = vmatprep.mubr.f32.mxu0 0.0
    %1414 = vmatmul.mubr.f32.gmra.mxu0 %v1286
    %v1415 = vpop.f32.mrf.mxu0
    %v1416 = vadd.f32 0.0, %v1415
    %v1417 = vpop.f32.mrf.mxu0
    %1418 = vmatprep.mubr.f32.mxu0 0.0
    %1419 = vmatmul.mubr.f32.gmra.mxu0 %v1289
    %v1420 = vpop.f32.mrf.mxu0
    %v1421 = vadd.f32 0.0, %v1420
    %v1422 = vpop.f32.mrf.mxu0
    %1423 = vmatprep.mubr.f32.mxu0 0.0
    %1424 = vmatmul.mubr.f32.gmra.mxu0 %v1292
    %v1425 = vpop.f32.mrf.mxu0
    %v1426 = vadd.f32 0.0, %v1425
    %v1427 = vpop.f32.mrf.mxu0
    %1428 = vmatprep.mubr.f32.mxu0 0.0
    %1429 = vmatmul.mubr.f32.gmra.mxu0 %v1295
    %v1430 = vpop.f32.mrf.mxu0
    %v1431 = vadd.f32 0.0, %v1430
    %v1432 = vpop.f32.mrf.mxu0
    %1433 = vmatprep.mubr.f32.mxu0 0.0
    %1434 = vmatmul.mubr.f32.gmra.mxu0 %v1298
    %v1435 = vpop.f32.mrf.mxu0
    %v1436 = vadd.f32 0.0, %v1435
    %v1437 = vpop.f32.mrf.mxu0
    %1438 = vmatprep.mubr.f32.mxu0 0.0
    %1439 = vmatmul.mubr.f32.gmra.mxu0 %v1301
    %v1440 = vpop.f32.mrf.mxu0
    %v1441 = vadd.f32 0.0, %v1440
    %v1442 = vpop.f32.mrf.mxu0
    %1443 = vmatprep.mubr.f32.mxu0 0.0
    %1444 = vmatmul.mubr.f32.gmra.mxu0 %v1304
    %v1445 = vpop.f32.mrf.mxu0
    %v1446 = vadd.f32 0.0, %v1445
    %v1447 = vpop.f32.mrf.mxu0
    %1448 = vmatprep.mubr.f32.mxu0 0.0
    %1449 = vmatmul.mubr.f32.gmra.mxu0 %v1307
    %v1450 = vpop.f32.mrf.mxu0
    %v1451 = vadd.f32 0.0, %v1450
    %v1452 = vpop.f32.mrf.mxu0
    %1453 = vdwg.mxu0
    %1454 = vxpose.xlu0.b32.start [1/16] %v1376, 128
    %1455 = vxpose.xlu0.b32.cont [2/16] %v1381, 128
    %1456 = vxpose.xlu0.b32.cont [3/16] %v1386, 128
    %1457 = vxpose.xlu0.b32.cont [4/16] %v1391, 128
    %1458 = vxpose.xlu0.b32.cont [5/16] %v1396, 128
    %1459 = vxpose.xlu0.b32.cont [6/16] %v1401, 128
    %1460 = vxpose.xlu0.b32.cont [7/16] %v1406, 128
    %1461 = vxpose.xlu0.b32.cont [8/16] %v1411, 128
    %1462 = vxpose.xlu0.b32.cont [9/16] %v1416, 128
    %1463 = vxpose.xlu0.b32.cont [10/16] %v1421, 128
    %1464 = vxpose.xlu0.b32.cont [11/16] %v1426, 128
    %1465 = vxpose.xlu0.b32.cont [12/16] %v1431, 128
    %1466 = vxpose.xlu0.b32.cont [13/16] %v1436, 128
    %1467 = vxpose.xlu0.b32.cont [14/16] %v1441, 128
    %1468 = vxpose.xlu0.b32.cont [15/16] %v1446, 128
    %1469 = vxpose.xlu0.b32.end [16/16] %v1451, 128
    %v1470 = vpop.trf.xlu0
    %v1471 = vpop.trf.xlu0
    %v1472 = vpop.trf.xlu0
    %v1473 = vpop.trf.xlu0
    %v1474 = vpop.trf.xlu0
    %v1475 = vpop.trf.xlu0
    %v1476 = vpop.trf.xlu0
    %v1477 = vpop.trf.xlu0
    %v1478 = vpop.trf.xlu0
    %v1479 = vpop.trf.xlu0
    %v1480 = vpop.trf.xlu0
    %v1481 = vpop.trf.xlu0
    %v1482 = vpop.trf.xlu0
    %v1483 = vpop.trf.xlu0
    %v1484 = vpop.trf.xlu0
    %v1485 = vpop.trf.xlu0
    %s1486 = scalar_lea.vmem %s0, 768
    %v1487 = vld [vmem:[%s1486] sm:$0xff]
    %v1488 = vld [vmem:[%s1486 + $0x8] sm:$0xff]
    %v1489 = vld [vmem:[%s1486 + $0x10] sm:$0xff]
    %v1490 = vld [vmem:[%s1486 + $0x18] sm:$0xff]
    %v1491 = vld [vmem:[%s1486 + $0x20] sm:$0xff]
    %v1492 = vld [vmem:[%s1486 + $0x28] sm:$0xff]
    %v1493 = vld [vmem:[%s1486 + $0x30] sm:$0xff]
    %v1494 = vld [vmem:[%s1486 + $0x38] sm:$0xff]
    %v1495 = vld [vmem:[%s1486 + $0x40] sm:$0xff]
    %v1496 = vld [vmem:[%s1486 + $0x48] sm:$0xff]
    %v1497 = vld [vmem:[%s1486 + $0x50] sm:$0xff]
    %v1498 = vld [vmem:[%s1486 + $0x58] sm:$0xff]
    %v1499 = vld [vmem:[%s1486 + $0x60] sm:$0xff]
    %v1500 = vld [vmem:[%s1486 + $0x68] sm:$0xff]
    %v1501 = vld [vmem:[%s1486 + $0x70] sm:$0xff]
    %v1502 = vld [vmem:[%s1486 + $0x78] sm:$0xff]
    %v1504 = vsel %vm46, %v1487, 0
    %v1507 = vsel %vm46, %v1488, 0
    %v1510 = vsel %vm46, %v1489, 0
    %v1513 = vsel %vm46, %v1490, 0
    %v1516 = vsel %vm46, %v1491, 0
    %v1519 = vsel %vm46, %v1492, 0
    %v1522 = vsel %vm46, %v1493, 0
    %v1525 = vsel %vm46, %v1494, 0
    %v1528 = vsel %vm46, %v1495, 0
    %v1531 = vsel %vm46, %v1496, 0
    %v1534 = vsel %vm46, %v1497, 0
    %v1537 = vsel %vm46, %v1498, 0
    %v1540 = vsel %vm46, %v1499, 0
    %v1543 = vsel %vm46, %v1500, 0
    %v1546 = vsel %vm46, %v1501, 0
    %v1549 = vsel %vm46, %v1502, 0
    %1551 = vmatprep.subr.mxu0 0.0
    %1552 = vmatpush1.msra.mxu0 0.0
    %1553 = vmatprep.subr.mxu0 0.0
    %1554 = vmatpush1.msra.mxu0 0.0
    %1555 = vmatprep.subr.mxu0 0.0
    %1556 = vmatpush1.msra.mxu0 0.0
    %1557 = vmatprep.subr.mxu0 0.0
    %1558 = vmatpush1.msra.mxu0 %v97
    %1559 = vmatprep.subr.mxu0 0.0
    %1560 = vmatpush1.msra.mxu0 %v27
    %1561 = vmatprep.subr.mxu0 0.0
    %1562 = vmatpush1.msra.mxu0 %v26
    %1563 = vmatprep.subr.mxu0 0.0
    %1564 = vmatpush1.msra.mxu0 %v25
    %1565 = vmatprep.subr.mxu0 0.0
    %1566 = vmatpush1.msra.mxu0 %v24
    %1567 = vmatprep.subr.mxu0 0.0
    %1568 = vmatpush1.msra.mxu0 %v23
    %1569 = vmatprep.subr.mxu0 0.0
    %1570 = vmatpush1.msra.mxu0 %v22
    %1571 = vmatprep.subr.mxu0 0.0
    %1572 = vmatpush1.msra.mxu0 %v21
    %1573 = vmatprep.subr.mxu0 0.0
    %1574 = vmatpush1.msra.mxu0 %v20
    %1575 = vmatprep.subr.mxu0 0.0
    %1576 = vmatpush1.msra.mxu0 %v19
    %1577 = vmatprep.subr.mxu0 0.0
    %1578 = vmatpush1.msra.mxu0 %v18
    %1579 = vmatprep.subr.mxu0 0.0
    %1580 = vmatpush1.msra.mxu0 %v17
    %1581 = vmatprep.subr.mxu0 0.0
    %1582 = vmatpush1.msra.mxu0 %v16
    %1583 = vmatprep.subr.mxu0 0.0
    %1584 = vmatpush2.msra.mxu0 0.0
    %1585 = vmatprep.subr.mxu0 0.0
    %1586 = vmatpush2.msra.mxu0 0.0
    %1587 = vmatprep.subr.mxu0 0.0
    %1588 = vmatpush2.msra.mxu0 0.0
    %1589 = vmatprep.subr.mxu0 0.0
    %1590 = vmatpush2.msra.mxu0 0.0
    %1591 = vmatprep.subr.mxu0 0.0
    %1592 = vmatpush2.msra.mxu0 0.0
    %1593 = vmatprep.subr.mxu0 0.0
    %1594 = vmatpush2.msra.mxu0 0.0
    %1595 = vmatprep.subr.mxu0 0.0
    %1596 = vmatpush2.msra.mxu0 0.0
    %1597 = vmatprep.subr.mxu0 0.0
    %1598 = vmatpush2.msra.mxu0 0.0
    %1599 = vmatprep.subr.mxu0 0.0
    %1600 = vmatpush2.msra.mxu0 0.0
    %1601 = vmatprep.subr.mxu0 0.0
    %1602 = vmatpush2.msra.mxu0 0.0
    %1603 = vmatprep.subr.mxu0 0.0
    %1604 = vmatpush2.msra.mxu0 0.0
    %1605 = vmatprep.subr.mxu0 0.0
    %1606 = vmatpush2.msra.mxu0 0.0
    %1607 = vmatprep.subr.mxu0 0.0
    %1608 = vmatpush2.msra.mxu0 0.0
    %1609 = vmatprep.subr.mxu0 0.0
    %1610 = vmatpush2.msra.mxu0 0.0
    %1611 = vmatprep.subr.mxu0 0.0
    %1612 = vmatpush2.msra.mxu0 0.0
    %1613 = vmatprep.subr.mxu0 0.0
    %1614 = vmatpush2.msra.mxu0 0.0
    %1615 = vmatprep.mubr.f32.mxu0 0.0
    %1616 = vmatmul.mubr.f32.gmra.mxu0 %v1504
    %v1617 = vpop.f32.mrf.mxu0
    %v1618 = vadd.f32 0.0, %v1617
    %v1619 = vpop.f32.mrf.mxu0
    %1620 = vmatprep.mubr.f32.mxu0 0.0
    %1621 = vmatmul.mubr.f32.gmra.mxu0 %v1507
    %v1622 = vpop.f32.mrf.mxu0
    %v1623 = vadd.f32 0.0, %v1622
    %v1624 = vpop.f32.mrf.mxu0
    %1625 = vmatprep.mubr.f32.mxu0 0.0
    %1626 = vmatmul.mubr.f32.gmra.mxu0 %v1510
    %v1627 = vpop.f32.mrf.mxu0
    %v1628 = vadd.f32 0.0, %v1627
    %v1629 = vpop.f32.mrf.mxu0
    %1630 = vmatprep.mubr.f32.mxu0 0.0
    %1631 = vmatmul.mubr.f32.gmra.mxu0 %v1513
    %v1632 = vpop.f32.mrf.mxu0
    %v1633 = vadd.f32 0.0, %v1632
    %v1634 = vpop.f32.mrf.mxu0
    %1635 = vmatprep.mubr.f32.mxu0 0.0
    %1636 = vmatmul.mubr.f32.gmra.mxu0 %v1516
    %v1637 = vpop.f32.mrf.mxu0
    %v1638 = vadd.f32 0.0, %v1637
    %v1639 = vpop.f32.mrf.mxu0
    %1640 = vmatprep.mubr.f32.mxu0 0.0
    %1641 = vmatmul.mubr.f32.gmra.mxu0 %v1519
    %v1642 = vpop.f32.mrf.mxu0
    %v1643 = vadd.f32 0.0, %v1642
    %v1644 = vpop.f32.mrf.mxu0
    %1645 = vmatprep.mubr.f32.mxu0 0.0
    %1646 = vmatmul.mubr.f32.gmra.mxu0 %v1522
    %v1647 = vpop.f32.mrf.mxu0
    %v1648 = vadd.f32 0.0, %v1647
    %v1649 = vpop.f32.mrf.mxu0
    %1650 = vmatprep.mubr.f32.mxu0 0.0
    %1651 = vmatmul.mubr.f32.gmra.mxu0 %v1525
    %v1652 = vpop.f32.mrf.mxu0
    %v1653 = vadd.f32 0.0, %v1652
    %v1654 = vpop.f32.mrf.mxu0
    %1655 = vmatprep.mubr.f32.mxu0 0.0
    %1656 = vmatmul.mubr.f32.gmra.mxu0 %v1528
    %v1657 = vpop.f32.mrf.mxu0
    %v1658 = vadd.f32 0.0, %v1657
    %v1659 = vpop.f32.mrf.mxu0
    %1660 = vmatprep.mubr.f32.mxu0 0.0
    %1661 = vmatmul.mubr.f32.gmra.mxu0 %v1531
    %v1662 = vpop.f32.mrf.mxu0
    %v1663 = vadd.f32 0.0, %v1662
    %v1664 = vpop.f32.mrf.mxu0
    %1665 = vmatprep.mubr.f32.mxu0 0.0
    %1666 = vmatmul.mubr.f32.gmra.mxu0 %v1534
    %v1667 = vpop.f32.mrf.mxu0
    %v1668 = vadd.f32 0.0, %v1667
    %v1669 = vpop.f32.mrf.mxu0
    %1670 = vmatprep.mubr.f32.mxu0 0.0
    %1671 = vmatmul.mubr.f32.gmra.mxu0 %v1537
    %v1672 = vpop.f32.mrf.mxu0
    %v1673 = vadd.f32 0.0, %v1672
    %v1674 = vpop.f32.mrf.mxu0
    %1675 = vmatprep.mubr.f32.mxu0 0.0
    %1676 = vmatmul.mubr.f32.gmra.mxu0 %v1540
    %v1677 = vpop.f32.mrf.mxu0
    %v1678 = vadd.f32 0.0, %v1677
    %v1679 = vpop.f32.mrf.mxu0
    %1680 = vmatprep.mubr.f32.mxu0 0.0
    %1681 = vmatmul.mubr.f32.gmra.mxu0 %v1543
    %v1682 = vpop.f32.mrf.mxu0
    %v1683 = vadd.f32 0.0, %v1682
    %v1684 = vpop.f32.mrf.mxu0
    %1685 = vmatprep.mubr.f32.mxu0 0.0
    %1686 = vmatmul.mubr.f32.gmra.mxu0 %v1546
    %v1687 = vpop.f32.mrf.mxu0
    %v1688 = vadd.f32 0.0, %v1687
    %v1689 = vpop.f32.mrf.mxu0
    %1690 = vmatprep.mubr.f32.mxu0 0.0
    %1691 = vmatmul.mubr.f32.gmra.mxu0 %v1549
    %v1692 = vpop.f32.mrf.mxu0
    %v1693 = vadd.f32 0.0, %v1692
    %v1694 = vpop.f32.mrf.mxu0
    %1695 = vdwg.mxu0
    %1696 = vxpose.xlu0.b32.start [1/16] %v1618, 128
    %1697 = vxpose.xlu0.b32.cont [2/16] %v1623, 128
    %1698 = vxpose.xlu0.b32.cont [3/16] %v1628, 128
    %1699 = vxpose.xlu0.b32.cont [4/16] %v1633, 128
    %1700 = vxpose.xlu0.b32.cont [5/16] %v1638, 128
    %1701 = vxpose.xlu0.b32.cont [6/16] %v1643, 128
    %1702 = vxpose.xlu0.b32.cont [7/16] %v1648, 128
    %1703 = vxpose.xlu0.b32.cont [8/16] %v1653, 128
    %1704 = vxpose.xlu0.b32.cont [9/16] %v1658, 128
    %1705 = vxpose.xlu0.b32.cont [10/16] %v1663, 128
    %1706 = vxpose.xlu0.b32.cont [11/16] %v1668, 128
    %1707 = vxpose.xlu0.b32.cont [12/16] %v1673, 128
    %1708 = vxpose.xlu0.b32.cont [13/16] %v1678, 128
    %1709 = vxpose.xlu0.b32.cont [14/16] %v1683, 128
    %1710 = vxpose.xlu0.b32.cont [15/16] %v1688, 128
    %1711 = vxpose.xlu0.b32.end [16/16] %v1693, 128
    %v1712 = vpop.trf.xlu0
    %v1713 = vpop.trf.xlu0
    %v1714 = vpop.trf.xlu0
    %v1715 = vpop.trf.xlu0
    %v1716 = vpop.trf.xlu0
    %v1717 = vpop.trf.xlu0
    %v1718 = vpop.trf.xlu0
    %v1719 = vpop.trf.xlu0
    %v1720 = vpop.trf.xlu0
    %v1721 = vpop.trf.xlu0
    %v1722 = vpop.trf.xlu0
    %v1723 = vpop.trf.xlu0
    %v1724 = vpop.trf.xlu0
    %v1725 = vpop.trf.xlu0
    %v1726 = vpop.trf.xlu0
    %v1727 = vpop.trf.xlu0
    %s1728 = scalar_lea.vmem %s0, 896
    %v1729 = vld [vmem:[%s1728] sm:$0xff]
    %v1730 = vld [vmem:[%s1728 + $0x8] sm:$0xff]
    %v1731 = vld [vmem:[%s1728 + $0x10] sm:$0xff]
    %v1732 = vld [vmem:[%s1728 + $0x18] sm:$0xff]
    %v1733 = vld [vmem:[%s1728 + $0x20] sm:$0xff]
    %v1734 = vld [vmem:[%s1728 + $0x28] sm:$0xff]
    %v1735 = vld [vmem:[%s1728 + $0x30] sm:$0xff]
    %v1736 = vld [vmem:[%s1728 + $0x38] sm:$0xff]
    %v1737 = vld [vmem:[%s1728 + $0x40] sm:$0xff]
    %v1738 = vld [vmem:[%s1728 + $0x48] sm:$0xff]
    %v1739 = vld [vmem:[%s1728 + $0x50] sm:$0xff]
    %v1740 = vld [vmem:[%s1728 + $0x58] sm:$0xff]
    %v1741 = vld [vmem:[%s1728 + $0x60] sm:$0xff]
    %v1742 = vld [vmem:[%s1728 + $0x68] sm:$0xff]
    %v1743 = vld [vmem:[%s1728 + $0x70] sm:$0xff]
    %v1744 = vld [vmem:[%s1728 + $0x78] sm:$0xff]
    %v1746 = vsel %vm46, %v1729, 0
    %v1749 = vsel %vm46, %v1730, 0
    %v1752 = vsel %vm46, %v1731, 0
    %v1755 = vsel %vm46, %v1732, 0
    %v1758 = vsel %vm46, %v1733, 0
    %v1761 = vsel %vm46, %v1734, 0
    %v1764 = vsel %vm46, %v1735, 0
    %v1767 = vsel %vm46, %v1736, 0
    %v1770 = vsel %vm46, %v1737, 0
    %v1773 = vsel %vm46, %v1738, 0
    %v1776 = vsel %vm46, %v1739, 0
    %v1779 = vsel %vm46, %v1740, 0
    %v1782 = vsel %vm46, %v1741, 0
    %v1785 = vsel %vm46, %v1742, 0
    %v1788 = vsel %vm46, %v1743, 0
    %v1791 = vsel %vm46, %v1744, 0
    %1793 = vmatprep.subr.mxu0 0.0
    %1794 = vmatpush1.msra.mxu0 0.0
    %1795 = vmatprep.subr.mxu0 0.0
    %1796 = vmatpush1.msra.mxu0 0.0
    %1797 = vmatprep.subr.mxu0 0.0
    %1798 = vmatpush1.msra.mxu0 0.0
    %1799 = vmatprep.subr.mxu0 0.0
    %1800 = vmatpush1.msra.mxu0 %v97
    %1801 = vmatprep.subr.mxu0 0.0
    %1802 = vmatpush1.msra.mxu0 %v27
    %1803 = vmatprep.subr.mxu0 0.0
    %1804 = vmatpush1.msra.mxu0 %v26
    %1805 = vmatprep.subr.mxu0 0.0
    %1806 = vmatpush1.msra.mxu0 %v25
    %1807 = vmatprep.subr.mxu0 0.0
    %1808 = vmatpush1.msra.mxu0 %v24
    %1809 = vmatprep.subr.mxu0 0.0
    %1810 = vmatpush1.msra.mxu0 %v23
    %1811 = vmatprep.subr.mxu0 0.0
    %1812 = vmatpush1.msra.mxu0 %v22
    %1813 = vmatprep.subr.mxu0 0.0
    %1814 = vmatpush1.msra.mxu0 %v21
    %1815 = vmatprep.subr.mxu0 0.0
    %1816 = vmatpush1.msra.mxu0 %v20
    %1817 = vmatprep.subr.mxu0 0.0
    %1818 = vmatpush1.msra.mxu0 %v19
    %1819 = vmatprep.subr.mxu0 0.0
    %1820 = vmatpush1.msra.mxu0 %v18
    %1821 = vmatprep.subr.mxu0 0.0
    %1822 = vmatpush1.msra.mxu0 %v17
    %1823 = vmatprep.subr.mxu0 0.0
    %1824 = vmatpush1.msra.mxu0 %v16
    %1825 = vmatprep.subr.mxu0 0.0
    %1826 = vmatpush2.msra.mxu0 0.0
    %1827 = vmatprep.subr.mxu0 0.0
    %1828 = vmatpush2.msra.mxu0 0.0
    %1829 = vmatprep.subr.mxu0 0.0
    %1830 = vmatpush2.msra.mxu0 0.0
    %1831 = vmatprep.subr.mxu0 0.0
    %1832 = vmatpush2.msra.mxu0 0.0
    %1833 = vmatprep.subr.mxu0 0.0
    %1834 = vmatpush2.msra.mxu0 0.0
    %1835 = vmatprep.subr.mxu0 0.0
    %1836 = vmatpush2.msra.mxu0 0.0
    %1837 = vmatprep.subr.mxu0 0.0
    %1838 = vmatpush2.msra.mxu0 0.0
    %1839 = vmatprep.subr.mxu0 0.0
    %1840 = vmatpush2.msra.mxu0 0.0
    %1841 = vmatprep.subr.mxu0 0.0
    %1842 = vmatpush2.msra.mxu0 0.0
    %1843 = vmatprep.subr.mxu0 0.0
    %1844 = vmatpush2.msra.mxu0 0.0
    %1845 = vmatprep.subr.mxu0 0.0
    %1846 = vmatpush2.msra.mxu0 0.0
    %1847 = vmatprep.subr.mxu0 0.0
    %1848 = vmatpush2.msra.mxu0 0.0
    %1849 = vmatprep.subr.mxu0 0.0
    %1850 = vmatpush2.msra.mxu0 0.0
    %1851 = vmatprep.subr.mxu0 0.0
    %1852 = vmatpush2.msra.mxu0 0.0
    %1853 = vmatprep.subr.mxu0 0.0
    %1854 = vmatpush2.msra.mxu0 0.0
    %1855 = vmatprep.subr.mxu0 0.0
    %1856 = vmatpush2.msra.mxu0 0.0
    %1857 = vmatprep.mubr.f32.mxu0 0.0
    %1858 = vmatmul.mubr.f32.gmra.mxu0 %v1746
    %v1859 = vpop.f32.mrf.mxu0
    %v1860 = vadd.f32 0.0, %v1859
    %v1861 = vpop.f32.mrf.mxu0
    %1862 = vmatprep.mubr.f32.mxu0 0.0
    %1863 = vmatmul.mubr.f32.gmra.mxu0 %v1749
    %v1864 = vpop.f32.mrf.mxu0
    %v1865 = vadd.f32 0.0, %v1864
    %v1866 = vpop.f32.mrf.mxu0
    %1867 = vmatprep.mubr.f32.mxu0 0.0
    %1868 = vmatmul.mubr.f32.gmra.mxu0 %v1752
    %v1869 = vpop.f32.mrf.mxu0
    %v1870 = vadd.f32 0.0, %v1869
    %v1871 = vpop.f32.mrf.mxu0
    %1872 = vmatprep.mubr.f32.mxu0 0.0
    %1873 = vmatmul.mubr.f32.gmra.mxu0 %v1755
    %v1874 = vpop.f32.mrf.mxu0
    %v1875 = vadd.f32 0.0, %v1874
    %v1876 = vpop.f32.mrf.mxu0
    %1877 = vmatprep.mubr.f32.mxu0 0.0
    %1878 = vmatmul.mubr.f32.gmra.mxu0 %v1758
    %v1879 = vpop.f32.mrf.mxu0
    %v1880 = vadd.f32 0.0, %v1879
    %v1881 = vpop.f32.mrf.mxu0
    %1882 = vmatprep.mubr.f32.mxu0 0.0
    %1883 = vmatmul.mubr.f32.gmra.mxu0 %v1761
    %v1884 = vpop.f32.mrf.mxu0
    %v1885 = vadd.f32 0.0, %v1884
    %v1886 = vpop.f32.mrf.mxu0
    %1887 = vmatprep.mubr.f32.mxu0 0.0
    %1888 = vmatmul.mubr.f32.gmra.mxu0 %v1764
    %v1889 = vpop.f32.mrf.mxu0
    %v1890 = vadd.f32 0.0, %v1889
    %v1891 = vpop.f32.mrf.mxu0
    %1892 = vmatprep.mubr.f32.mxu0 0.0
    %1893 = vmatmul.mubr.f32.gmra.mxu0 %v1767
    %v1894 = vpop.f32.mrf.mxu0
    %v1895 = vadd.f32 0.0, %v1894
    %v1896 = vpop.f32.mrf.mxu0
    %1897 = vmatprep.mubr.f32.mxu0 0.0
    %1898 = vmatmul.mubr.f32.gmra.mxu0 %v1770
    %v1899 = vpop.f32.mrf.mxu0
    %v1900 = vadd.f32 0.0, %v1899
    %v1901 = vpop.f32.mrf.mxu0
    %1902 = vmatprep.mubr.f32.mxu0 0.0
    %1903 = vmatmul.mubr.f32.gmra.mxu0 %v1773
    %v1904 = vpop.f32.mrf.mxu0
    %v1905 = vadd.f32 0.0, %v1904
    %v1906 = vpop.f32.mrf.mxu0
    %1907 = vmatprep.mubr.f32.mxu0 0.0
    %1908 = vmatmul.mubr.f32.gmra.mxu0 %v1776
    %v1909 = vpop.f32.mrf.mxu0
    %v1910 = vadd.f32 0.0, %v1909
    %v1911 = vpop.f32.mrf.mxu0
    %1912 = vmatprep.mubr.f32.mxu0 0.0
    %1913 = vmatmul.mubr.f32.gmra.mxu0 %v1779
    %v1914 = vpop.f32.mrf.mxu0
    %v1915 = vadd.f32 0.0, %v1914
    %v1916 = vpop.f32.mrf.mxu0
    %1917 = vmatprep.mubr.f32.mxu0 0.0
    %1918 = vmatmul.mubr.f32.gmra.mxu0 %v1782
    %v1919 = vpop.f32.mrf.mxu0
    %v1920 = vadd.f32 0.0, %v1919
    %v1921 = vpop.f32.mrf.mxu0
    %1922 = vmatprep.mubr.f32.mxu0 0.0
    %1923 = vmatmul.mubr.f32.gmra.mxu0 %v1785
    %v1924 = vpop.f32.mrf.mxu0
    %v1925 = vadd.f32 0.0, %v1924
    %v1926 = vpop.f32.mrf.mxu0
    %1927 = vmatprep.mubr.f32.mxu0 0.0
    %1928 = vmatmul.mubr.f32.gmra.mxu0 %v1788
    %v1929 = vpop.f32.mrf.mxu0
    %v1930 = vadd.f32 0.0, %v1929
    %v1931 = vpop.f32.mrf.mxu0
    %1932 = vmatprep.mubr.f32.mxu0 0.0
    %1933 = vmatmul.mubr.f32.gmra.mxu0 %v1791
    %v1934 = vpop.f32.mrf.mxu0
    %v1935 = vadd.f32 0.0, %v1934
    %v1936 = vpop.f32.mrf.mxu0
    %1937 = vdwg.mxu0
    %1938 = vxpose.xlu0.b32.start [1/16] %v1860, 128
    %1939 = vxpose.xlu0.b32.cont [2/16] %v1865, 128
    %1940 = vxpose.xlu0.b32.cont [3/16] %v1870, 128
    %1941 = vxpose.xlu0.b32.cont [4/16] %v1875, 128
    %1942 = vxpose.xlu0.b32.cont [5/16] %v1880, 128
    %1943 = vxpose.xlu0.b32.cont [6/16] %v1885, 128
    %1944 = vxpose.xlu0.b32.cont [7/16] %v1890, 128
    %1945 = vxpose.xlu0.b32.cont [8/16] %v1895, 128
    %1946 = vxpose.xlu0.b32.cont [9/16] %v1900, 128
    %1947 = vxpose.xlu0.b32.cont [10/16] %v1905, 128
    %1948 = vxpose.xlu0.b32.cont [11/16] %v1910, 128
    %1949 = vxpose.xlu0.b32.cont [12/16] %v1915, 128
    %1950 = vxpose.xlu0.b32.cont [13/16] %v1920, 128
    %1951 = vxpose.xlu0.b32.cont [14/16] %v1925, 128
    %1952 = vxpose.xlu0.b32.cont [15/16] %v1930, 128
    %1953 = vxpose.xlu0.b32.end [16/16] %v1935, 128
    %v1954 = vpop.trf.xlu0
    %v1955 = vpop.trf.xlu0
    %v1956 = vpop.trf.xlu0
    %v1957 = vpop.trf.xlu0
    %v1958 = vpop.trf.xlu0
    %v1959 = vpop.trf.xlu0
    %v1960 = vpop.trf.xlu0
    %v1961 = vpop.trf.xlu0
    %v1962 = vpop.trf.xlu0
    %v1963 = vpop.trf.xlu0
    %v1964 = vpop.trf.xlu0
    %v1965 = vpop.trf.xlu0
    %v1966 = vpop.trf.xlu0
    %v1967 = vpop.trf.xlu0
    %v1968 = vpop.trf.xlu0
    %v1969 = vpop.trf.xlu0
    %v1971 = vrot.slane %v502, 7
    %v1974 = vrot.slane %v744, 6
    %v1977 = vrot.slane %v986, 5
    %v1980 = vrot.slane %v1228, 4
    %v1983 = vrot.slane %v1470, 3
    %v1986 = vrot.slane %v1712, 2
    %v1989 = vrot.slane %v1954, 1
    %vm1991 = vcmask 1040384
    %v1992 = vsel %vm1991, %v260, %v1971
    %vm1993 = vcmask 1041408
    %v1994 = vsel %vm1993, %v1992, %v1974
    %vm1995 = vcmask 1042432
    %v1996 = vsel %vm1995, %v1994, %v1977
    %v1997 = vsel %vm95, %v1996, %v1980
    %vm1998 = vcmask 1044480
    %v1999 = vsel %vm1998, %v1997, %v1983
    %vm2000 = vcmask 1045504
    %v2001 = vsel %vm2000, %v1999, %v1986
    %vm2002 = vcmask 1046528
    %v2003 = vsel %vm2002, %v2001, %v1989
    %v2004 = vstv %s29
    %v2005 = vadd.f32 %v2003, %v2004
    %v2006 = vsub.f32 0.0, %v2005
    %v2007 = vmul.f32 %v2006, 1.442695
    %v2008 = vpow.pop %v2007
    %v2009 = vadd.f32 %v2008, 1.0
    %v2010 = vrcp.pop %v2009
    %2011 = vst [vmem:[#allocation3] sm:$0xff] %v2010
    // Predicated region
    $region14: #{tpu_custom_call.1} parent=1 // pred_check
      _
    $region15: #{tpu_custom_call.1} parent=1 // pred_check_branch
      %2013 = sbr.rel (0) target = $region17
    $region16: #{tpu_custom_call.1} parent=1 // pred_region
      %s2015 = ssub.s32 128, 128
      %2016 = vsyncadd [#allocation4], %s2015
      %s2018 = sshll.u32 [#allocation3], 4
      %s2019 = int_to_ptr.vmem [resolvable:$true] %s2018
      %2021 = dma.vmem_to_hbm [thread:$0]  %s2019, 128, %s3, [#allocation4]
    $region17: #{tpu_custom_call.1} parent=1 // pred_fallthru
      _
    // Predicated region
    $region18: #{tpu_custom_call.1} parent=1 // pred_check
      _
    $region19: #{tpu_custom_call.1} parent=1 // pred_check_branch
      %2023 = sbr.rel (0) target = $region21
    $region20: #{tpu_custom_call.1} parent=1 // pred_region
      %2024 = dma.done [#allocation4], 128
    $region21: #{tpu_custom_call.1} parent=1 // pred_fallthru
      _
    %2025 = vsyncpa [#allocation4], 1

</llo_original>
